<compile_context>
chip_gen: v6e
topology: v6e:2x2x1
jax: 0.10.0
libtpu: 0.0.40
codegen_flags: <defaults>
</compile_context>

<pallas_src>
import numpy as np
import jax
import jax.numpy as jnp
from jax import lax
from jax.experimental import pallas as pl
from jax.experimental.pallas import tpu as pltpu

# ----------------------------- configuration --------------------------------
ARM_DIM = 8          # arm pose dimension (even, split in half by the coupling layer)
CART_DIM = 3         # cartesian pose dimension
HIDDEN = 32          # hidden width of the Conditional_Net
BATCH = 8            # batch size
NUM_LAYERS = 3       # number of coupling+permute layers
NOISE_SCALE = 0.01
EPSILON = 1e-9       # log-det epsilon (forward default)
BN_EPS = 1e-5        # nn.BatchNorm1d default eps

IN_DIM = ARM_DIM // 2 + CART_DIM + 1          # conditional-net input width (= 8)
OUT_DIM = ARM_DIM                             # final linear output (chunked into s, t)
OUT_SLAB = 128                                # lane-dense packed output width
# layer_specs equivalent: [(IN_DIM, HIDDEN, True), (HIDDEN, HIDDEN, True), (HIDDEN, OUT_DIM, True)]
# activation equivalent: nn.ReLU


# ------------------------------- Pallas kernel -------------------------------
def flow_kernel(c_ref, arm_ref, cart_ref, noise_ref, perm_ref,
                w1_ref, b1_ref, w2_ref, b2_ref, w3_ref, b3_ref,
                out_ref, cond_buf, arm_buf):
    """Full Normalizing_Flow_Net.forward (all coupling + permute layers fused).

    c_ref    : SMEM (1,)                     unbatched scalar c
    arm_ref  : (B, ARM_DIM)                  batched arm poses
    cart_ref : (B, CART_DIM)                 batched cartesian poses
    noise_ref: (NUM_LAYERS, B, IN_DIM)       pre-drawn gaussian noise * noise_scale
    perm_ref : (NUM_LAYERS, B, ARM_DIM, ARM_DIM)  per-row permutation one-hots
    w*/b*    : Linear weights (in, out) and biases (1, out)
    out_ref  : (B, OUT_SLAB) lane-dense slab = [arm_poses | log_det | zeros]
    cond_buf : VMEM scratch (B, IN_DIM)      conditional-input assembly buffer
    arm_buf  : VMEM scratch (B, ARM_DIM)     const/altered re-assembly buffer
    """
    B, arm_dim = arm_ref.shape
    half = arm_dim // 2

    # Static parts of the conditional input (cart poses, c column) written once.
    cond_buf[:, half:half + CART_DIM] = cart_ref[...]
    cond_buf[:, half + CART_DIM:] = jnp.full((B, 1), c_ref[0], jnp.float32)

    arm = arm_ref[...]
    logdet = jnp.zeros((B, 1), jnp.float32)

    def linear_bn_relu(h, w_ref, b_ref):
        h = jnp.dot(h, w_ref[...], preferred_element_type=jnp.float32) + b_ref[...]
        # BatchNorm1d in training mode: batch mean / biased batch var, gamma=1, beta=0
        bm = jnp.mean(h, axis=0, keepdims=True)
        bv = jnp.mean((h - bm) ** 2, axis=0, keepdims=True)
        h = (h - bm) * lax.rsqrt(bv + BN_EPS)
        return jnp.maximum(h, 0.0)                           # activation = ReLU

    # NUM_LAYERS is tiny and static -> unrolled; everything stays in vregs/VMEM.
    for i in range(NUM_LAYERS):
        const = arm[:, :half]
        altered = arm[:, half:]

        # conditional_input = cat(const_arm, cart, c) + noise
        cond_buf[:, :half] = const
        cond = cond_buf[...] + noise_ref[i]

        # Conditional_Net: global standardization with torch-style unbiased std.
        n_elems = cond.shape[0] * cond.shape[1]
        mean = jnp.sum(cond) / n_elems
        var_unbiased = jnp.sum((cond - mean) ** 2) / (n_elems - 1)
        inv_std = lax.rsqrt(var_unbiased)                    # EUP rsqrt, reused twice
        h = (cond - mean) * inv_std

        h = linear_bn_relu(h, w1_ref, b1_ref)
        h = linear_bn_relu(h, w2_ref, b2_ref)
        # final Linear: no BatchNorm / activation
        out = jnp.dot(h, w3_ref[...], preferred_element_type=jnp.float32) + b3_ref[...]

        s = out[:, :half]                                    # layer_out.chunk(2, dim=1)
        t = out[:, half:]

        # affine coupling on the (conditional-net-normalized) altered half
        alt_n = (altered - mean) * inv_std
        new_alt = alt_n * jnp.exp(s) + t

        # per-layer log-det contribution: mean(log(|s| + eps), dim=1, keepdims)
        logdet = logdet + jnp.mean(jnp.log(jnp.abs(s) + EPSILON), axis=1, keepdims=True)

        # Permute_Layer: per-row permutation of cat(const, new_alt) applied via
        # precomputed one-hot matrices (elementwise multiply + lane reduce).
        arm_buf[:, :half] = const
        arm_buf[:, half:] = new_alt
        arm_cat = arm_buf[...]
        arm = jnp.sum(perm_ref[i] * arm_cat[:, None, :], axis=2)

    # Lane-dense packed output: one full-width store, then two tiny slice stores.
    out_ref[...] = jnp.zeros((B, OUT_SLAB), jnp.float32)
    out_ref[:, :arm_dim] = arm
    out_ref[:, arm_dim:arm_dim + 1] = logdet


# ------------------------------ glue / wrapper --------------------------------
def init_conditional_net_params(key):
    """Kaiming-normal (fan_in, gain=sqrt(2)) weights, zero biases.

    Weights stored as (in, out) so the kernel computes x @ W.
    """
    specs = [(IN_DIM, HIDDEN), (HIDDEN, HIDDEN), (HIDDEN, OUT_DIM)]
    params = []
    for (fan_in, fan_out) in specs:
        key, sub = jax.random.split(key)
        w = jax.random.normal(sub, (fan_in, fan_out), jnp.float32) * np.sqrt(2.0 / fan_in)
        b = jnp.zeros((1, fan_out), jnp.float32)
        params.extend([w, b])
    return tuple(params)


def build_permutation_onehots(batch, arm_dim, permute_seed, num_layers):
    """Precompute ALL layers' per-row permutations (host numpy, matching
    Permute_Layer's np.random.default_rng use) as one-hot matrices so the
    permutation can be applied on-device inside the fused kernel."""
    onehots = np.zeros((num_layers, batch, arm_dim, arm_dim), np.float32)
    for i in range(num_layers):
        rng = np.random.default_rng(seed=permute_seed + i)
        for b in range(batch):
            perm = rng.permutation(arm_dim)
            onehots[i, b, np.arange(arm_dim), perm] = 1.0
    return jnp.asarray(onehots)


def normalizing_flow_forward(arm_poses, cart_poses, c, perm_onehot, noise, params):
    """Normalizing_Flow_Net.forward: returns (arm_poses, log_det_jacobian)."""
    B, arm_dim = arm_poses.shape
    w1, b1, w2, b2, w3, b3 = params
    c_arr = jnp.reshape(c, (1,)).astype(jnp.float32)

    vmem = pl.BlockSpec(memory_space=pltpu.MemorySpace.VMEM)
    smem = pl.BlockSpec(memory_space=pltpu.MemorySpace.SMEM)

    slab = pl.pallas_call(
        flow_kernel,
        out_shape=jax.ShapeDtypeStruct((B, OUT_SLAB), jnp.float32),
        in_specs=[smem] + [vmem] * 10,
        out_specs=vmem,
        scratch_shapes=[pltpu.VMEM((B, IN_DIM), jnp.float32),
                        pltpu.VMEM((B, arm_dim), jnp.float32)],
        compiler_params=pltpu.CompilerParams(vmem_limit_bytes=4 * 1024 * 1024),
    )(c_arr, arm_poses, cart_poses, noise, perm_onehot, w1, b1, w2, b2, w3, b3)

    return slab[:, :arm_dim], slab[:, arm_dim:arm_dim + 1]


# ----------------------------------- main -------------------------------------
if __name__ == "__main__":
    key = jax.random.PRNGKey(0)
    k_params, k_arm, k_cart, k_c, k_noise = jax.random.split(key, 5)

    params = init_conditional_net_params(k_params)

    arm_poses = jax.random.normal(k_arm, (BATCH, ARM_DIM), jnp.float32)
    cart_poses = jax.random.normal(k_cart, (BATCH, CART_DIM), jnp.float32)
    c = jax.random.uniform(k_c, (), jnp.float32)             # unbatched scalar c
    permute_seed = 42

    # All layers' noise drawn in ONE call; all permutations precomputed host-side
    # BEFORE any device work (no per-layer host<->device serialization).
    noise = jax.random.normal(
        k_noise, (NUM_LAYERS, BATCH, IN_DIM), jnp.float32) * NOISE_SCALE
    perm_onehot = build_permutation_onehots(BATCH, ARM_DIM, permute_seed, NUM_LAYERS)

    fwd = jax.jit(normalizing_flow_forward)
    new_arm, log_det = fwd(arm_poses, cart_poses, c, perm_onehot, noise, params)

    new_arm = jax.block_until_ready(new_arm)
    log_det = jax.block_until_ready(log_det)

    assert new_arm.shape == (BATCH, ARM_DIM)
    assert log_det.shape == (BATCH, 1)
    assert bool(jnp.all(jnp.isfinite(new_arm))) and bool(jnp.all(jnp.isfinite(log_det)))
    print("KERNEL_OK")
</pallas_src>

<mosaic_0001>
module attributes {stable_mosaic.version = 11 : i64} {
  func.func @flow_kernel(%arg0: memref<1xf32, #tpu.memory_space<smem>>, %arg1: memref<8x8xf32, #tpu.memory_space<vmem>>, %arg2: memref<8x3xf32, #tpu.memory_space<vmem>>, %arg3: memref<3x8x8xf32, #tpu.memory_space<vmem>>, %arg4: memref<3x8x8x8xf32, #tpu.memory_space<vmem>>, %arg5: memref<8x32xf32, #tpu.memory_space<vmem>>, %arg6: memref<1x32xf32, #tpu.memory_space<vmem>>, %arg7: memref<32x32xf32, #tpu.memory_space<vmem>>, %arg8: memref<1x32xf32, #tpu.memory_space<vmem>>, %arg9: memref<32x8xf32, #tpu.memory_space<vmem>>, %arg10: memref<1x8xf32, #tpu.memory_space<vmem>>, %arg11: memref<8x128xf32, #tpu.memory_space<vmem>>, %arg12: memref<8x8xf32, #tpu.memory_space<vmem>>, %arg13: memref<8x8xf32, #tpu.memory_space<vmem>>) attributes {dimension_semantics = [], scalar_prefetch = 0 : i64, scratch_operands = 2 : i64, tpu.core_type = #tpu.core_type<tc>} {
    %c0 = arith.constant 0 : index
    %c0_0 = arith.constant 0 : index
    %0 = vector.load %arg2[%c0, %c0_0] : memref<8x3xf32, #tpu.memory_space<vmem>>, vector<8x3xf32>
    %c0_1 = arith.constant 0 : index
    %c4 = arith.constant 4 : index
    %1 = vector.load %arg12[%c0_1, %c4] : memref<8x8xf32, #tpu.memory_space<vmem>>, vector<8x3xf32>
    tpu.vector_store %arg12[%c0_1, %c4], %0 {strides = array<i32>} : memref<8x8xf32, #tpu.memory_space<vmem>>, vector<8x3xf32>,
    %c0_2 = arith.constant 0 : index
    %2 = memref.load %arg0[%c0_2] : memref<1xf32, #tpu.memory_space<smem>>
    %3 = vector.broadcast %2 : f32 to vector<8x1xf32>
    %c0_3 = arith.constant 0 : index
    %c7 = arith.constant 7 : index
    %4 = vector.load %arg12[%c0_3, %c7] : memref<8x8xf32, #tpu.memory_space<vmem>>, vector<8x1xf32>
    tpu.vector_store %arg12[%c0_3, %c7], %3 {strides = array<i32>} : memref<8x8xf32, #tpu.memory_space<vmem>>, vector<8x1xf32>,
    %c0_4 = arith.constant 0 : index
    %c0_5 = arith.constant 0 : index
    %5 = vector.load %arg1[%c0_4, %c0_5] : memref<8x8xf32, #tpu.memory_space<vmem>>, vector<8x8xf32>
    %cst = arith.constant 0.000000e+00 : f32
    %6 = vector.broadcast %cst : f32 to vector<8x1xf32>
    %7 = vector.extract_strided_slice %5 {offsets = [0, 0], sizes = [8, 4], strides = [1, 1]} : vector<8x8xf32> to vector<8x4xf32>
    %8 = vector.extract_strided_slice %5 {offsets = [0, 4], sizes = [8, 4], strides = [1, 1]} : vector<8x8xf32> to vector<8x4xf32>
    %c0_6 = arith.constant 0 : index
    %c0_7 = arith.constant 0 : index
    %9 = vector.load %arg12[%c0_6, %c0_7] : memref<8x8xf32, #tpu.memory_space<vmem>>, vector<8x4xf32>
    tpu.vector_store %arg12[%c0_6, %c0_7], %7 {strides = array<i32>} : memref<8x8xf32, #tpu.memory_space<vmem>>, vector<8x4xf32>,
    %c0_8 = arith.constant 0 : index
    %c0_9 = arith.constant 0 : index
    %10 = vector.load %arg12[%c0_8, %c0_9] : memref<8x8xf32, #tpu.memory_space<vmem>>, vector<8x8xf32>
    %c0_10 = arith.constant 0 : index
    %c0_11 = arith.constant 0 : index
    %c0_12 = arith.constant 0 : index
    %11 = vector.load %arg3[%c0_10, %c0_11, %c0_12] : memref<3x8x8xf32, #tpu.memory_space<vmem>>, vector<1x8x8xf32>
    %12 = vector.shape_cast %11 : vector<1x8x8xf32> to vector<8x8xf32>
    %13 = arith.addf %10, %12 : vector<8x8xf32>
    %14 = vector.shape_cast %13 : vector<8x8xf32> to vector<1x8x8xf32>
    %cst_13 = arith.constant dense<0.000000e+00> : vector<1xf32>
    %15 = vector.multi_reduction <add>, %14, %cst_13 [1, 2] : vector<1x8x8xf32> to vector<1xf32>
    %16 = vector.shape_cast %15 : vector<1xf32> to vector<1x1x1xf32>
    %17 = vector.extract %16[0, 0, 0] : f32 from vector<1x1x1xf32>
    %cst_14 = arith.constant 6.400000e+01 : f32
    %18 = arith.divf %17, %cst_14 : f32
    %19 = vector.broadcast %18 : f32 to vector<8x8xf32>
    %20 = arith.subf %13, %19 : vector<8x8xf32>
    %21 = arith.mulf %20, %20 : vector<8x8xf32>
    %22 = vector.shape_cast %21 : vector<8x8xf32> to vector<1x8x8xf32>
    %cst_15 = arith.constant dense<0.000000e+00> : vector<1xf32>
    %23 = vector.multi_reduction <add>, %22, %cst_15 [1, 2] : vector<1x8x8xf32> to vector<1xf32>
    %24 = vector.shape_cast %23 : vector<1xf32> to vector<1x1x1xf32>
    %25 = vector.extract %24[0, 0, 0] : f32 from vector<1x1x1xf32>
    %cst_16 = arith.constant 6.300000e+01 : f32
    %26 = arith.divf %25, %cst_16 : f32
    %27 = math.rsqrt %26 : f32
    %28 = vector.broadcast %18 : f32 to vector<8x8xf32>
    %29 = arith.subf %13, %28 : vector<8x8xf32>
    %30 = vector.broadcast %27 : f32 to vector<8x8xf32>
    %31 = arith.mulf %29, %30 : vector<8x8xf32>
    %c0_17 = arith.constant 0 : index
    %c0_18 = arith.constant 0 : index
    %32 = vector.load %arg5[%c0_17, %c0_18] : memref<8x32xf32, #tpu.memory_space<vmem>>, vector<8x32xf32>
    %cst_19 = arith.constant dense<0.000000e+00> : vector<8x32xf32>
    %33 = tpu.matmul %31, %32, %cst_19 {dimension_numbers = #tpu.dot_dimension_numbers<[1], [0], [0], [1], [0, 0, 1, 1], [], []>} : vector<8x8xf32>, vector<8x32xf32>, vector<8x32xf32> -> vector<8x32xf32>
    %c0_20 = arith.constant 0 : index
    %c0_21 = arith.constant 0 : index
    %34 = vector.load %arg6[%c0_20, %c0_21] : memref<1x32xf32, #tpu.memory_space<vmem>>, vector<1x32xf32>
    %35 = vector.broadcast %34 : vector<1x32xf32> to vector<8x32xf32>
    %36 = arith.addf %33, %35 : vector<8x32xf32>
    %cst_22 = arith.constant dense<0.000000e+00> : vector<32xf32>
    %37 = vector.multi_reduction <add>, %36, %cst_22 [0] : vector<8x32xf32> to vector<32xf32>
    %38 = vector.shape_cast %37 : vector<32xf32> to vector<1x32xf32>
    %cst_23 = arith.constant 8.000000e+00 : f32
    %39 = vector.broadcast %cst_23 : f32 to vector<1x32xf32>
    %40 = arith.divf %38, %39 : vector<1x32xf32>
    %41 = vector.broadcast %40 : vector<1x32xf32> to vector<8x32xf32>
    %42 = arith.subf %36, %41 : vector<8x32xf32>
    %43 = arith.mulf %42, %42 : vector<8x32xf32>
    %cst_24 = arith.constant dense<0.000000e+00> : vector<32xf32>
    %44 = vector.multi_reduction <add>, %43, %cst_24 [0] : vector<8x32xf32> to vector<32xf32>
    %45 = vector.shape_cast %44 : vector<32xf32> to vector<1x32xf32>
    %cst_25 = arith.constant 8.000000e+00 : f32
    %46 = vector.broadcast %cst_25 : f32 to vector<1x32xf32>
    %47 = arith.divf %45, %46 : vector<1x32xf32>
    %48 = vector.broadcast %40 : vector<1x32xf32> to vector<8x32xf32>
    %49 = arith.subf %36, %48 : vector<8x32xf32>
    %cst_26 = arith.constant 9.99999974E-6 : f32
    %50 = vector.broadcast %cst_26 : f32 to vector<1x32xf32>
    %51 = arith.addf %47, %50 : vector<1x32xf32>
    %52 = math.rsqrt %51 : vector<1x32xf32>
    %53 = vector.broadcast %52 : vector<1x32xf32> to vector<8x32xf32>
    %54 = arith.mulf %49, %53 : vector<8x32xf32>
    %cst_27 = arith.constant 0.000000e+00 : f32
    %55 = vector.broadcast %cst_27 : f32 to vector<8x32xf32>
    %56 = arith.maximumf %54, %55 : vector<8x32xf32>
    %c0_28 = arith.constant 0 : index
    %c0_29 = arith.constant 0 : index
    %57 = vector.load %arg7[%c0_28, %c0_29] : memref<32x32xf32, #tpu.memory_space<vmem>>, vector<32x32xf32>
    %cst_30 = arith.constant dense<0.000000e+00> : vector<8x32xf32>
    %58 = tpu.matmul %56, %57, %cst_30 {dimension_numbers = #tpu.dot_dimension_numbers<[1], [0], [0], [1], [0, 0, 1, 1], [], []>} : vector<8x32xf32>, vector<32x32xf32>, vector<8x32xf32> -> vector<8x32xf32>
    %c0_31 = arith.constant 0 : index
    %c0_32 = arith.constant 0 : index
    %59 = vector.load %arg8[%c0_31, %c0_32] : memref<1x32xf32, #tpu.memory_space<vmem>>, vector<1x32xf32>
    %60 = vector.broadcast %59 : vector<1x32xf32> to vector<8x32xf32>
    %61 = arith.addf %58, %60 : vector<8x32xf32>
    %cst_33 = arith.constant dense<0.000000e+00> : vector<32xf32>
    %62 = vector.multi_reduction <add>, %61, %cst_33 [0] : vector<8x32xf32> to vector<32xf32>
    %63 = vector.shape_cast %62 : vector<32xf32> to vector<1x32xf32>
    %cst_34 = arith.constant 8.000000e+00 : f32
    %64 = vector.broadcast %cst_34 : f32 to vector<1x32xf32>
    %65 = arith.divf %63, %64 : vector<1x32xf32>
    %66 = vector.broadcast %65 : vector<1x32xf32> to vector<8x32xf32>
    %67 = arith.subf %61, %66 : vector<8x32xf32>
    %68 = arith.mulf %67, %67 : vector<8x32xf32>
    %cst_35 = arith.constant dense<0.000000e+00> : vector<32xf32>
    %69 = vector.multi_reduction <add>, %68, %cst_35 [0] : vector<8x32xf32> to vector<32xf32>
    %70 = vector.shape_cast %69 : vector<32xf32> to vector<1x32xf32>
    %cst_36 = arith.constant 8.000000e+00 : f32
    %71 = vector.broadcast %cst_36 : f32 to vector<1x32xf32>
    %72 = arith.divf %70, %71 : vector<1x32xf32>
    %73 = vector.broadcast %65 : vector<1x32xf32> to vector<8x32xf32>
    %74 = arith.subf %61, %73 : vector<8x32xf32>
    %cst_37 = arith.constant 9.99999974E-6 : f32
    %75 = vector.broadcast %cst_37 : f32 to vector<1x32xf32>
    %76 = arith.addf %72, %75 : vector<1x32xf32>
    %77 = math.rsqrt %76 : vector<1x32xf32>
    %78 = vector.broadcast %77 : vector<1x32xf32> to vector<8x32xf32>
    %79 = arith.mulf %74, %78 : vector<8x32xf32>
    %cst_38 = arith.constant 0.000000e+00 : f32
    %80 = vector.broadcast %cst_38 : f32 to vector<8x32xf32>
    %81 = arith.maximumf %79, %80 : vector<8x32xf32>
    %c0_39 = arith.constant 0 : index
    %c0_40 = arith.constant 0 : index
    %82 = vector.load %arg9[%c0_39, %c0_40] : memref<32x8xf32, #tpu.memory_space<vmem>>, vector<32x8xf32>
    %cst_41 = arith.constant dense<0.000000e+00> : vector<8x8xf32>
    %83 = tpu.matmul %81, %82, %cst_41 {dimension_numbers = #tpu.dot_dimension_numbers<[1], [0], [0], [1], [0, 0, 1, 1], [], []>} : vector<8x32xf32>, vector<32x8xf32>, vector<8x8xf32> -> vector<8x8xf32>
    %c0_42 = arith.constant 0 : index
    %c0_43 = arith.constant 0 : index
    %84 = vector.load %arg10[%c0_42, %c0_43] : memref<1x8xf32, #tpu.memory_space<vmem>>, vector<1x8xf32>
    %85 = vector.broadcast %84 : vector<1x8xf32> to vector<8x8xf32>
    %86 = arith.addf %83, %85 : vector<8x8xf32>
    %87 = vector.extract_strided_slice %86 {offsets = [0, 0], sizes = [8, 4], strides = [1, 1]} : vector<8x8xf32> to vector<8x4xf32>
    %88 = vector.extract_strided_slice %86 {offsets = [0, 4], sizes = [8, 4], strides = [1, 1]} : vector<8x8xf32> to vector<8x4xf32>
    %89 = vector.broadcast %18 : f32 to vector<8x4xf32>
    %90 = arith.subf %8, %89 : vector<8x4xf32>
    %91 = vector.broadcast %27 : f32 to vector<8x4xf32>
    %92 = arith.mulf %90, %91 : vector<8x4xf32>
    %93 = math.exp %87 : vector<8x4xf32>
    %94 = arith.mulf %92, %93 : vector<8x4xf32>
    %95 = arith.addf %94, %88 : vector<8x4xf32>
    %96 = math.absf %87 : vector<8x4xf32>
    %cst_44 = arith.constant 9.99999971E-10 : f32
    %97 = vector.broadcast %cst_44 : f32 to vector<8x4xf32>
    %98 = arith.addf %96, %97 : vector<8x4xf32>
    %99 = math.log %98 : vector<8x4xf32>
    %cst_45 = arith.constant dense<0.000000e+00> : vector<8xf32>
    %100 = vector.multi_reduction <add>, %99, %cst_45 [1] : vector<8x4xf32> to vector<8xf32>
    %101 = vector.shape_cast %100 : vector<8xf32> to vector<8x1xf32>
    %cst_46 = arith.constant 4.000000e+00 : f32
    %102 = vector.broadcast %cst_46 : f32 to vector<8x1xf32>
    %103 = arith.divf %101, %102 : vector<8x1xf32>
    %104 = arith.addf %6, %103 : vector<8x1xf32>
    %c0_47 = arith.constant 0 : index
    %c0_48 = arith.constant 0 : index
    %105 = vector.load %arg13[%c0_47, %c0_48] : memref<8x8xf32, #tpu.memory_space<vmem>>, vector<8x4xf32>
    tpu.vector_store %arg13[%c0_47, %c0_48], %7 {strides = array<i32>} : memref<8x8xf32, #tpu.memory_space<vmem>>, vector<8x4xf32>,
    %c0_49 = arith.constant 0 : index
    %c4_50 = arith.constant 4 : index
    %106 = vector.load %arg13[%c0_49, %c4_50] : memref<8x8xf32, #tpu.memory_space<vmem>>, vector<8x4xf32>
    tpu.vector_store %arg13[%c0_49, %c4_50], %95 {strides = array<i32>} : memref<8x8xf32, #tpu.memory_space<vmem>>, vector<8x4xf32>,
    %c0_51 = arith.constant 0 : index
    %c0_52 = arith.constant 0 : index
    %107 = vector.load %arg13[%c0_51, %c0_52] : memref<8x8xf32, #tpu.memory_space<vmem>>, vector<8x8xf32>
    %c0_53 = arith.constant 0 : index
    %c0_54 = arith.constant 0 : index
    %c0_55 = arith.constant 0 : index
    %c0_56 = arith.constant 0 : index
    %108 = vector.load %arg4[%c0_53, %c0_54, %c0_55, %c0_56] : memref<3x8x8x8xf32, #tpu.memory_space<vmem>>, vector<1x8x8x8xf32>
    %109 = vector.shape_cast %108 : vector<1x8x8x8xf32> to vector<8x8x8xf32>
    %110 = vector.shape_cast %107 : vector<8x8xf32> to vector<8x1x8xf32>
    %111 = vector.broadcast %110 : vector<8x1x8xf32> to vector<8x8x8xf32>
    %112 = arith.mulf %109, %111 : vector<8x8x8xf32>
    %cst_57 = arith.constant dense<0.000000e+00> : vector<8x8xf32>
    %113 = vector.multi_reduction <add>, %112, %cst_57 [2] : vector<8x8x8xf32> to vector<8x8xf32>
    %114 = vector.extract_strided_slice %113 {offsets = [0, 0], sizes = [8, 4], strides = [1, 1]} : vector<8x8xf32> to vector<8x4xf32>
    %115 = vector.extract_strided_slice %113 {offsets = [0, 4], sizes = [8, 4], strides = [1, 1]} : vector<8x8xf32> to vector<8x4xf32>
    %c0_58 = arith.constant 0 : index
    %c0_59 = arith.constant 0 : index
    %116 = vector.load %arg12[%c0_58, %c0_59] : memref<8x8xf32, #tpu.memory_space<vmem>>, vector<8x4xf32>
    tpu.vector_store %arg12[%c0_58, %c0_59], %114 {strides = array<i32>} : memref<8x8xf32, #tpu.memory_space<vmem>>, vector<8x4xf32>,
    %c0_60 = arith.constant 0 : index
    %c0_61 = arith.constant 0 : index
    %117 = vector.load %arg12[%c0_60, %c0_61] : memref<8x8xf32, #tpu.memory_space<vmem>>, vector<8x8xf32>
    %c1 = arith.constant 1 : index
    %c0_62 = arith.constant 0 : index
    %c0_63 = arith.constant 0 : index
    %118 = vector.load %arg3[%c1, %c0_62, %c0_63] : memref<3x8x8xf32, #tpu.memory_space<vmem>>, vector<1x8x8xf32>
    %119 = vector.shape_cast %118 : vector<1x8x8xf32> to vector<8x8xf32>
    %120 = arith.addf %117, %119 : vector<8x8xf32>
    %121 = vector.shape_cast %120 : vector<8x8xf32> to vector<1x8x8xf32>
    %cst_64 = arith.constant dense<0.000000e+00> : vector<1xf32>
    %122 = vector.multi_reduction <add>, %121, %cst_64 [1, 2] : vector<1x8x8xf32> to vector<1xf32>
    %123 = vector.shape_cast %122 : vector<1xf32> to vector<1x1x1xf32>
    %124 = vector.extract %123[0, 0, 0] : f32 from vector<1x1x1xf32>
    %cst_65 = arith.constant 6.400000e+01 : f32
    %125 = arith.divf %124, %cst_65 : f32
    %126 = vector.broadcast %125 : f32 to vector<8x8xf32>
    %127 = arith.subf %120, %126 : vector<8x8xf32>
    %128 = arith.mulf %127, %127 : vector<8x8xf32>
    %129 = vector.shape_cast %128 : vector<8x8xf32> to vector<1x8x8xf32>
    %cst_66 = arith.constant dense<0.000000e+00> : vector<1xf32>
    %130 = vector.multi_reduction <add>, %129, %cst_66 [1, 2] : vector<1x8x8xf32> to vector<1xf32>
    %131 = vector.shape_cast %130 : vector<1xf32> to vector<1x1x1xf32>
    %132 = vector.extract %131[0, 0, 0] : f32 from vector<1x1x1xf32>
    %cst_67 = arith.constant 6.300000e+01 : f32
    %133 = arith.divf %132, %cst_67 : f32
    %134 = math.rsqrt %133 : f32
    %135 = vector.broadcast %125 : f32 to vector<8x8xf32>
    %136 = arith.subf %120, %135 : vector<8x8xf32>
    %137 = vector.broadcast %134 : f32 to vector<8x8xf32>
    %138 = arith.mulf %136, %137 : vector<8x8xf32>
    %c0_68 = arith.constant 0 : index
    %c0_69 = arith.constant 0 : index
    %139 = vector.load %arg5[%c0_68, %c0_69] : memref<8x32xf32, #tpu.memory_space<vmem>>, vector<8x32xf32>
    %cst_70 = arith.constant dense<0.000000e+00> : vector<8x32xf32>
    %140 = tpu.matmul %138, %139, %cst_70 {dimension_numbers = #tpu.dot_dimension_numbers<[1], [0], [0], [1], [0, 0, 1, 1], [], []>} : vector<8x8xf32>, vector<8x32xf32>, vector<8x32xf32> -> vector<8x32xf32>
    %c0_71 = arith.constant 0 : index
    %c0_72 = arith.constant 0 : index
    %141 = vector.load %arg6[%c0_71, %c0_72] : memref<1x32xf32, #tpu.memory_space<vmem>>, vector<1x32xf32>
    %142 = vector.broadcast %141 : vector<1x32xf32> to vector<8x32xf32>
    %143 = arith.addf %140, %142 : vector<8x32xf32>
    %cst_73 = arith.constant dense<0.000000e+00> : vector<32xf32>
    %144 = vector.multi_reduction <add>, %143, %cst_73 [0] : vector<8x32xf32> to vector<32xf32>
    %145 = vector.shape_cast %144 : vector<32xf32> to vector<1x32xf32>
    %cst_74 = arith.constant 8.000000e+00 : f32
    %146 = vector.broadcast %cst_74 : f32 to vector<1x32xf32>
    %147 = arith.divf %145, %146 : vector<1x32xf32>
    %148 = vector.broadcast %147 : vector<1x32xf32> to vector<8x32xf32>
    %149 = arith.subf %143, %148 : vector<8x32xf32>
    %150 = arith.mulf %149, %149 : vector<8x32xf32>
    %cst_75 = arith.constant dense<0.000000e+00> : vector<32xf32>
    %151 = vector.multi_reduction <add>, %150, %cst_75 [0] : vector<8x32xf32> to vector<32xf32>
    %152 = vector.shape_cast %151 : vector<32xf32> to vector<1x32xf32>
    %cst_76 = arith.constant 8.000000e+00 : f32
    %153 = vector.broadcast %cst_76 : f32 to vector<1x32xf32>
    %154 = arith.divf %152, %153 : vector<1x32xf32>
    %155 = vector.broadcast %147 : vector<1x32xf32> to vector<8x32xf32>
    %156 = arith.subf %143, %155 : vector<8x32xf32>
    %cst_77 = arith.constant 9.99999974E-6 : f32
    %157 = vector.broadcast %cst_77 : f32 to vector<1x32xf32>
    %158 = arith.addf %154, %157 : vector<1x32xf32>
    %159 = math.rsqrt %158 : vector<1x32xf32>
    %160 = vector.broadcast %159 : vector<1x32xf32> to vector<8x32xf32>
    %161 = arith.mulf %156, %160 : vector<8x32xf32>
    %cst_78 = arith.constant 0.000000e+00 : f32
    %162 = vector.broadcast %cst_78 : f32 to vector<8x32xf32>
    %163 = arith.maximumf %161, %162 : vector<8x32xf32>
    %c0_79 = arith.constant 0 : index
    %c0_80 = arith.constant 0 : index
    %164 = vector.load %arg7[%c0_79, %c0_80] : memref<32x32xf32, #tpu.memory_space<vmem>>, vector<32x32xf32>
    %cst_81 = arith.constant dense<0.000000e+00> : vector<8x32xf32>
    %165 = tpu.matmul %163, %164, %cst_81 {dimension_numbers = #tpu.dot_dimension_numbers<[1], [0], [0], [1], [0, 0, 1, 1], [], []>} : vector<8x32xf32>, vector<32x32xf32>, vector<8x32xf32> -> vector<8x32xf32>
    %c0_82 = arith.constant 0 : index
    %c0_83 = arith.constant 0 : index
    %166 = vector.load %arg8[%c0_82, %c0_83] : memref<1x32xf32, #tpu.memory_space<vmem>>, vector<1x32xf32>
    %167 = vector.broadcast %166 : vector<1x32xf32> to vector<8x32xf32>
    %168 = arith.addf %165, %167 : vector<8x32xf32>
    %cst_84 = arith.constant dense<0.000000e+00> : vector<32xf32>
    %169 = vector.multi_reduction <add>, %168, %cst_84 [0] : vector<8x32xf32> to vector<32xf32>
    %170 = vector.shape_cast %169 : vector<32xf32> to vector<1x32xf32>
    %cst_85 = arith.constant 8.000000e+00 : f32
    %171 = vector.broadcast %cst_85 : f32 to vector<1x32xf32>
    %172 = arith.divf %170, %171 : vector<1x32xf32>
    %173 = vector.broadcast %172 : vector<1x32xf32> to vector<8x32xf32>
    %174 = arith.subf %168, %173 : vector<8x32xf32>
    %175 = arith.mulf %174, %174 : vector<8x32xf32>
    %cst_86 = arith.constant dense<0.000000e+00> : vector<32xf32>
    %176 = vector.multi_reduction <add>, %175, %cst_86 [0] : vector<8x32xf32> to vector<32xf32>
    %177 = vector.shape_cast %176 : vector<32xf32> to vector<1x32xf32>
    %cst_87 = arith.constant 8.000000e+00 : f32
    %178 = vector.broadcast %cst_87 : f32 to vector<1x32xf32>
    %179 = arith.divf %177, %178 : vector<1x32xf32>
    %180 = vector.broadcast %172 : vector<1x32xf32> to vector<8x32xf32>
    %181 = arith.subf %168, %180 : vector<8x32xf32>
    %cst_88 = arith.constant 9.99999974E-6 : f32
    %182 = vector.broadcast %cst_88 : f32 to vector<1x32xf32>
    %183 = arith.addf %179, %182 : vector<1x32xf32>
    %184 = math.rsqrt %183 : vector<1x32xf32>
    %185 = vector.broadcast %184 : vector<1x32xf32> to vector<8x32xf32>
    %186 = arith.mulf %181, %185 : vector<8x32xf32>
    %cst_89 = arith.constant 0.000000e+00 : f32
    %187 = vector.broadcast %cst_89 : f32 to vector<8x32xf32>
    %188 = arith.maximumf %186, %187 : vector<8x32xf32>
    %c0_90 = arith.constant 0 : index
    %c0_91 = arith.constant 0 : index
    %189 = vector.load %arg9[%c0_90, %c0_91] : memref<32x8xf32, #tpu.memory_space<vmem>>, vector<32x8xf32>
    %cst_92 = arith.constant dense<0.000000e+00> : vector<8x8xf32>
    %190 = tpu.matmul %188, %189, %cst_92 {dimension_numbers = #tpu.dot_dimension_numbers<[1], [0], [0], [1], [0, 0, 1, 1], [], []>} : vector<8x32xf32>, vector<32x8xf32>, vector<8x8xf32> -> vector<8x8xf32>
    %c0_93 = arith.constant 0 : index
    %c0_94 = arith.constant 0 : index
    %191 = vector.load %arg10[%c0_93, %c0_94] : memref<1x8xf32, #tpu.memory_space<vmem>>, vector<1x8xf32>
    %192 = vector.broadcast %191 : vector<1x8xf32> to vector<8x8xf32>
    %193 = arith.addf %190, %192 : vector<8x8xf32>
    %194 = vector.extract_strided_slice %193 {offsets = [0, 0], sizes = [8, 4], strides = [1, 1]} : vector<8x8xf32> to vector<8x4xf32>
    %195 = vector.extract_strided_slice %193 {offsets = [0, 4], sizes = [8, 4], strides = [1, 1]} : vector<8x8xf32> to vector<8x4xf32>
    %196 = vector.broadcast %125 : f32 to vector<8x4xf32>
    %197 = arith.subf %115, %196 : vector<8x4xf32>
    %198 = vector.broadcast %134 : f32 to vector<8x4xf32>
    %199 = arith.mulf %197, %198 : vector<8x4xf32>
    %200 = math.exp %194 : vector<8x4xf32>
    %201 = arith.mulf %199, %200 : vector<8x4xf32>
    %202 = arith.addf %201, %195 : vector<8x4xf32>
    %203 = math.absf %194 : vector<8x4xf32>
    %cst_95 = arith.constant 9.99999971E-10 : f32
    %204 = vector.broadcast %cst_95 : f32 to vector<8x4xf32>
    %205 = arith.addf %203, %204 : vector<8x4xf32>
    %206 = math.log %205 : vector<8x4xf32>
    %cst_96 = arith.constant dense<0.000000e+00> : vector<8xf32>
    %207 = vector.multi_reduction <add>, %206, %cst_96 [1] : vector<8x4xf32> to vector<8xf32>
    %208 = vector.shape_cast %207 : vector<8xf32> to vector<8x1xf32>
    %cst_97 = arith.constant 4.000000e+00 : f32
    %209 = vector.broadcast %cst_97 : f32 to vector<8x1xf32>
    %210 = arith.divf %208, %209 : vector<8x1xf32>
    %211 = arith.addf %104, %210 : vector<8x1xf32>
    %c0_98 = arith.constant 0 : index
    %c0_99 = arith.constant 0 : index
    %212 = vector.load %arg13[%c0_98, %c0_99] : memref<8x8xf32, #tpu.memory_space<vmem>>, vector<8x4xf32>
    tpu.vector_store %arg13[%c0_98, %c0_99], %114 {strides = array<i32>} : memref<8x8xf32, #tpu.memory_space<vmem>>, vector<8x4xf32>,
    %c0_100 = arith.constant 0 : index
    %c4_101 = arith.constant 4 : index
    %213 = vector.load %arg13[%c0_100, %c4_101] : memref<8x8xf32, #tpu.memory_space<vmem>>, vector<8x4xf32>
    tpu.vector_store %arg13[%c0_100, %c4_101], %202 {strides = array<i32>} : memref<8x8xf32, #tpu.memory_space<vmem>>, vector<8x4xf32>,
    %c0_102 = arith.constant 0 : index
    %c0_103 = arith.constant 0 : index
    %214 = vector.load %arg13[%c0_102, %c0_103] : memref<8x8xf32, #tpu.memory_space<vmem>>, vector<8x8xf32>
    %c1_104 = arith.constant 1 : index
    %c0_105 = arith.constant 0 : index
    %c0_106 = arith.constant 0 : index
    %c0_107 = arith.constant 0 : index
    %215 = vector.load %arg4[%c1_104, %c0_105, %c0_106, %c0_107] : memref<3x8x8x8xf32, #tpu.memory_space<vmem>>, vector<1x8x8x8xf32>
    %216 = vector.shape_cast %215 : vector<1x8x8x8xf32> to vector<8x8x8xf32>
    %217 = vector.shape_cast %214 : vector<8x8xf32> to vector<8x1x8xf32>
    %218 = vector.broadcast %217 : vector<8x1x8xf32> to vector<8x8x8xf32>
    %219 = arith.mulf %216, %218 : vector<8x8x8xf32>
    %cst_108 = arith.constant dense<0.000000e+00> : vector<8x8xf32>
    %220 = vector.multi_reduction <add>, %219, %cst_108 [2] : vector<8x8x8xf32> to vector<8x8xf32>
    %221 = vector.extract_strided_slice %220 {offsets = [0, 0], sizes = [8, 4], strides = [1, 1]} : vector<8x8xf32> to vector<8x4xf32>
    %222 = vector.extract_strided_slice %220 {offsets = [0, 4], sizes = [8, 4], strides = [1, 1]} : vector<8x8xf32> to vector<8x4xf32>
    %c0_109 = arith.constant 0 : index
    %c0_110 = arith.constant 0 : index
    %223 = vector.load %arg12[%c0_109, %c0_110] : memref<8x8xf32, #tpu.memory_space<vmem>>, vector<8x4xf32>
    tpu.vector_store %arg12[%c0_109, %c0_110], %221 {strides = array<i32>} : memref<8x8xf32, #tpu.memory_space<vmem>>, vector<8x4xf32>,
    %c0_111 = arith.constant 0 : index
    %c0_112 = arith.constant 0 : index
    %224 = vector.load %arg12[%c0_111, %c0_112] : memref<8x8xf32, #tpu.memory_space<vmem>>, vector<8x8xf32>
    %c2 = arith.constant 2 : index
    %c0_113 = arith.constant 0 : index
    %c0_114 = arith.constant 0 : index
    %225 = vector.load %arg3[%c2, %c0_113, %c0_114] : memref<3x8x8xf32, #tpu.memory_space<vmem>>, vector<1x8x8xf32>
    %226 = vector.shape_cast %225 : vector<1x8x8xf32> to vector<8x8xf32>
    %227 = arith.addf %224, %226 : vector<8x8xf32>
    %228 = vector.shape_cast %227 : vector<8x8xf32> to vector<1x8x8xf32>
    %cst_115 = arith.constant dense<0.000000e+00> : vector<1xf32>
    %229 = vector.multi_reduction <add>, %228, %cst_115 [1, 2] : vector<1x8x8xf32> to vector<1xf32>
    %230 = vector.shape_cast %229 : vector<1xf32> to vector<1x1x1xf32>
    %231 = vector.extract %230[0, 0, 0] : f32 from vector<1x1x1xf32>
    %cst_116 = arith.constant 6.400000e+01 : f32
    %232 = arith.divf %231, %cst_116 : f32
    %233 = vector.broadcast %232 : f32 to vector<8x8xf32>
    %234 = arith.subf %227, %233 : vector<8x8xf32>
    %235 = arith.mulf %234, %234 : vector<8x8xf32>
    %236 = vector.shape_cast %235 : vector<8x8xf32> to vector<1x8x8xf32>
    %cst_117 = arith.constant dense<0.000000e+00> : vector<1xf32>
    %237 = vector.multi_reduction <add>, %236, %cst_117 [1, 2] : vector<1x8x8xf32> to vector<1xf32>
    %238 = vector.shape_cast %237 : vector<1xf32> to vector<1x1x1xf32>
    %239 = vector.extract %238[0, 0, 0] : f32 from vector<1x1x1xf32>
    %cst_118 = arith.constant 6.300000e+01 : f32
    %240 = arith.divf %239, %cst_118 : f32
    %241 = math.rsqrt %240 : f32
    %242 = vector.broadcast %232 : f32 to vector<8x8xf32>
    %243 = arith.subf %227, %242 : vector<8x8xf32>
    %244 = vector.broadcast %241 : f32 to vector<8x8xf32>
    %245 = arith.mulf %243, %244 : vector<8x8xf32>
    %c0_119 = arith.constant 0 : index
    %c0_120 = arith.constant 0 : index
    %246 = vector.load %arg5[%c0_119, %c0_120] : memref<8x32xf32, #tpu.memory_space<vmem>>, vector<8x32xf32>
    %cst_121 = arith.constant dense<0.000000e+00> : vector<8x32xf32>
    %247 = tpu.matmul %245, %246, %cst_121 {dimension_numbers = #tpu.dot_dimension_numbers<[1], [0], [0], [1], [0, 0, 1, 1], [], []>} : vector<8x8xf32>, vector<8x32xf32>, vector<8x32xf32> -> vector<8x32xf32>
    %c0_122 = arith.constant 0 : index
    %c0_123 = arith.constant 0 : index
    %248 = vector.load %arg6[%c0_122, %c0_123] : memref<1x32xf32, #tpu.memory_space<vmem>>, vector<1x32xf32>
    %249 = vector.broadcast %248 : vector<1x32xf32> to vector<8x32xf32>
    %250 = arith.addf %247, %249 : vector<8x32xf32>
    %cst_124 = arith.constant dense<0.000000e+00> : vector<32xf32>
    %251 = vector.multi_reduction <add>, %250, %cst_124 [0] : vector<8x32xf32> to vector<32xf32>
    %252 = vector.shape_cast %251 : vector<32xf32> to vector<1x32xf32>
    %cst_125 = arith.constant 8.000000e+00 : f32
    %253 = vector.broadcast %cst_125 : f32 to vector<1x32xf32>
    %254 = arith.divf %252, %253 : vector<1x32xf32>
    %255 = vector.broadcast %254 : vector<1x32xf32> to vector<8x32xf32>
    %256 = arith.subf %250, %255 : vector<8x32xf32>
    %257 = arith.mulf %256, %256 : vector<8x32xf32>
    %cst_126 = arith.constant dense<0.000000e+00> : vector<32xf32>
    %258 = vector.multi_reduction <add>, %257, %cst_126 [0] : vector<8x32xf32> to vector<32xf32>
    %259 = vector.shape_cast %258 : vector<32xf32> to vector<1x32xf32>
    %cst_127 = arith.constant 8.000000e+00 : f32
    %260 = vector.broadcast %cst_127 : f32 to vector<1x32xf32>
    %261 = arith.divf %259, %260 : vector<1x32xf32>
    %262 = vector.broadcast %254 : vector<1x32xf32> to vector<8x32xf32>
    %263 = arith.subf %250, %262 : vector<8x32xf32>
    %cst_128 = arith.constant 9.99999974E-6 : f32
    %264 = vector.broadcast %cst_128 : f32 to vector<1x32xf32>
    %265 = arith.addf %261, %264 : vector<1x32xf32>
    %266 = math.rsqrt %265 : vector<1x32xf32>
    %267 = vector.broadcast %266 : vector<1x32xf32> to vector<8x32xf32>
    %268 = arith.mulf %263, %267 : vector<8x32xf32>
    %cst_129 = arith.constant 0.000000e+00 : f32
    %269 = vector.broadcast %cst_129 : f32 to vector<8x32xf32>
    %270 = arith.maximumf %268, %269 : vector<8x32xf32>
    %c0_130 = arith.constant 0 : index
    %c0_131 = arith.constant 0 : index
    %271 = vector.load %arg7[%c0_130, %c0_131] : memref<32x32xf32, #tpu.memory_space<vmem>>, vector<32x32xf32>
    %cst_132 = arith.constant dense<0.000000e+00> : vector<8x32xf32>
    %272 = tpu.matmul %270, %271, %cst_132 {dimension_numbers = #tpu.dot_dimension_numbers<[1], [0], [0], [1], [0, 0, 1, 1], [], []>} : vector<8x32xf32>, vector<32x32xf32>, vector<8x32xf32> -> vector<8x32xf32>
    %c0_133 = arith.constant 0 : index
    %c0_134 = arith.constant 0 : index
    %273 = vector.load %arg8[%c0_133, %c0_134] : memref<1x32xf32, #tpu.memory_space<vmem>>, vector<1x32xf32>
    %274 = vector.broadcast %273 : vector<1x32xf32> to vector<8x32xf32>
    %275 = arith.addf %272, %274 : vector<8x32xf32>
    %cst_135 = arith.constant dense<0.000000e+00> : vector<32xf32>
    %276 = vector.multi_reduction <add>, %275, %cst_135 [0] : vector<8x32xf32> to vector<32xf32>
    %277 = vector.shape_cast %276 : vector<32xf32> to vector<1x32xf32>
    %cst_136 = arith.constant 8.000000e+00 : f32
    %278 = vector.broadcast %cst_136 : f32 to vector<1x32xf32>
    %279 = arith.divf %277, %278 : vector<1x32xf32>
    %280 = vector.broadcast %279 : vector<1x32xf32> to vector<8x32xf32>
    %281 = arith.subf %275, %280 : vector<8x32xf32>
    %282 = arith.mulf %281, %281 : vector<8x32xf32>
    %cst_137 = arith.constant dense<0.000000e+00> : vector<32xf32>
    %283 = vector.multi_reduction <add>, %282, %cst_137 [0] : vector<8x32xf32> to vector<32xf32>
    %284 = vector.shape_cast %283 : vector<32xf32> to vector<1x32xf32>
    %cst_138 = arith.constant 8.000000e+00 : f32
    %285 = vector.broadcast %cst_138 : f32 to vector<1x32xf32>
    %286 = arith.divf %284, %285 : vector<1x32xf32>
    %287 = vector.broadcast %279 : vector<1x32xf32> to vector<8x32xf32>
    %288 = arith.subf %275, %287 : vector<8x32xf32>
    %cst_139 = arith.constant 9.99999974E-6 : f32
    %289 = vector.broadcast %cst_139 : f32 to vector<1x32xf32>
    %290 = arith.addf %286, %289 : vector<1x32xf32>
    %291 = math.rsqrt %290 : vector<1x32xf32>
    %292 = vector.broadcast %291 : vector<1x32xf32> to vector<8x32xf32>
    %293 = arith.mulf %288, %292 : vector<8x32xf32>
    %cst_140 = arith.constant 0.000000e+00 : f32
    %294 = vector.broadcast %cst_140 : f32 to vector<8x32xf32>
    %295 = arith.maximumf %293, %294 : vector<8x32xf32>
    %c0_141 = arith.constant 0 : index
    %c0_142 = arith.constant 0 : index
    %296 = vector.load %arg9[%c0_141, %c0_142] : memref<32x8xf32, #tpu.memory_space<vmem>>, vector<32x8xf32>
    %cst_143 = arith.constant dense<0.000000e+00> : vector<8x8xf32>
    %297 = tpu.matmul %295, %296, %cst_143 {dimension_numbers = #tpu.dot_dimension_numbers<[1], [0], [0], [1], [0, 0, 1, 1], [], []>} : vector<8x32xf32>, vector<32x8xf32>, vector<8x8xf32> -> vector<8x8xf32>
    %c0_144 = arith.constant 0 : index
    %c0_145 = arith.constant 0 : index
    %298 = vector.load %arg10[%c0_144, %c0_145] : memref<1x8xf32, #tpu.memory_space<vmem>>, vector<1x8xf32>
    %299 = vector.broadcast %298 : vector<1x8xf32> to vector<8x8xf32>
    %300 = arith.addf %297, %299 : vector<8x8xf32>
    %301 = vector.extract_strided_slice %300 {offsets = [0, 0], sizes = [8, 4], strides = [1, 1]} : vector<8x8xf32> to vector<8x4xf32>
    %302 = vector.extract_strided_slice %300 {offsets = [0, 4], sizes = [8, 4], strides = [1, 1]} : vector<8x8xf32> to vector<8x4xf32>
    %303 = vector.broadcast %232 : f32 to vector<8x4xf32>
    %304 = arith.subf %222, %303 : vector<8x4xf32>
    %305 = vector.broadcast %241 : f32 to vector<8x4xf32>
    %306 = arith.mulf %304, %305 : vector<8x4xf32>
    %307 = math.exp %301 : vector<8x4xf32>
    %308 = arith.mulf %306, %307 : vector<8x4xf32>
    %309 = arith.addf %308, %302 : vector<8x4xf32>
    %310 = math.absf %301 : vector<8x4xf32>
    %cst_146 = arith.constant 9.99999971E-10 : f32
    %311 = vector.broadcast %cst_146 : f32 to vector<8x4xf32>
    %312 = arith.addf %310, %311 : vector<8x4xf32>
    %313 = math.log %312 : vector<8x4xf32>
    %cst_147 = arith.constant dense<0.000000e+00> : vector<8xf32>
    %314 = vector.multi_reduction <add>, %313, %cst_147 [1] : vector<8x4xf32> to vector<8xf32>
    %315 = vector.shape_cast %314 : vector<8xf32> to vector<8x1xf32>
    %cst_148 = arith.constant 4.000000e+00 : f32
    %316 = vector.broadcast %cst_148 : f32 to vector<8x1xf32>
    %317 = arith.divf %315, %316 : vector<8x1xf32>
    %318 = arith.addf %211, %317 : vector<8x1xf32>
    %c0_149 = arith.constant 0 : index
    %c0_150 = arith.constant 0 : index
    %319 = vector.load %arg13[%c0_149, %c0_150] : memref<8x8xf32, #tpu.memory_space<vmem>>, vector<8x4xf32>
    tpu.vector_store %arg13[%c0_149, %c0_150], %221 {strides = array<i32>} : memref<8x8xf32, #tpu.memory_space<vmem>>, vector<8x4xf32>,
    %c0_151 = arith.constant 0 : index
    %c4_152 = arith.constant 4 : index
    %320 = vector.load %arg13[%c0_151, %c4_152] : memref<8x8xf32, #tpu.memory_space<vmem>>, vector<8x4xf32>
    tpu.vector_store %arg13[%c0_151, %c4_152], %309 {strides = array<i32>} : memref<8x8xf32, #tpu.memory_space<vmem>>, vector<8x4xf32>,
    %c0_153 = arith.constant 0 : index
    %c0_154 = arith.constant 0 : index
    %321 = vector.load %arg13[%c0_153, %c0_154] : memref<8x8xf32, #tpu.memory_space<vmem>>, vector<8x8xf32>
    %c2_155 = arith.constant 2 : index
    %c0_156 = arith.constant 0 : index
    %c0_157 = arith.constant 0 : index
    %c0_158 = arith.constant 0 : index
    %322 = vector.load %arg4[%c2_155, %c0_156, %c0_157, %c0_158] : memref<3x8x8x8xf32, #tpu.memory_space<vmem>>, vector<1x8x8x8xf32>
    %323 = vector.shape_cast %322 : vector<1x8x8x8xf32> to vector<8x8x8xf32>
    %324 = vector.shape_cast %321 : vector<8x8xf32> to vector<8x1x8xf32>
    %325 = vector.broadcast %324 : vector<8x1x8xf32> to vector<8x8x8xf32>
    %326 = arith.mulf %323, %325 : vector<8x8x8xf32>
    %cst_159 = arith.constant dense<0.000000e+00> : vector<8x8xf32>
    %327 = vector.multi_reduction <add>, %326, %cst_159 [2] : vector<8x8x8xf32> to vector<8x8xf32>
    %cst_160 = arith.constant 0.000000e+00 : f32
    %328 = vector.broadcast %cst_160 : f32 to vector<8x128xf32>
    %c0_161 = arith.constant 0 : index
    %c0_162 = arith.constant 0 : index
    %329 = vector.load %arg11[%c0_161, %c0_162] : memref<8x128xf32, #tpu.memory_space<vmem>>, vector<8x128xf32>
    tpu.vector_store %arg11[%c0_161, %c0_162], %328 {strides = array<i32>} : memref<8x128xf32, #tpu.memory_space<vmem>>, vector<8x128xf32>,
    %c0_163 = arith.constant 0 : index
    %c0_164 = arith.constant 0 : index
    %330 = vector.load %arg11[%c0_163, %c0_164] : memref<8x128xf32, #tpu.memory_space<vmem>>, vector<8x8xf32>
    tpu.vector_store %arg11[%c0_163, %c0_164], %327 {strides = array<i32>} : memref<8x128xf32, #tpu.memory_space<vmem>>, vector<8x8xf32>,
    %c0_165 = arith.constant 0 : index
    %c8 = arith.constant 8 : index
    %331 = vector.load %arg11[%c0_165, %c8] : memref<8x128xf32, #tpu.memory_space<vmem>>, vector<8x1xf32>
    tpu.vector_store %arg11[%c0_165, %c8], %318 {strides = array<i32>} : memref<8x128xf32, #tpu.memory_space<vmem>>, vector<8x1xf32>,
    return
  }
}

</mosaic_0001>

<llo_original>
// kernel: normalizing_flow_forward.1
$region0: #{normalizing_flow_forward.1}
  #allocation0 [shape = 'u32[]', space=smem, size = 0x4, offset = 0x4, fixed_abs, tag = 'smem constant byte address 0x4 - core index']
  #allocation1 [shape = 'u32[144,128]{1,0:T(1,128)}', space=vmem, size = 0x12000, scoped, tag = 'internal scratch']
  #allocation2 [shape = 'f32[8,8]{1,0:T(8,128)}', space=vmem, size = 0x1000, scoped, tag = 'scratch operand']
  #allocation3 [shape = 'f32[8,8]{1,0:T(8,128)}', space=vmem, size = 0x1000, scoped, tag = 'scratch operand']
  #allocation4 [shape = 'f32[1]{0:T(128)S(6)}', space=smem, size = 0x200, scoped, tag = 'scoped memory for normalizing_flow_forward.1']
  %s0 = inlined_call_operand.<no memory space> [shape: f32[1], index: 0, kind: input, shape index: {}]
  %s1 = inlined_call_operand.hbm [shape: f32[8,8], index: 1, kind: input, shape index: {}]
  %s2 = inlined_call_operand.vmem [shape: f32[8,3], index: 2, kind: input, shape index: {}]
  %s3 = inlined_call_operand.vmem [shape: f32[3,8,8], index: 3, kind: input, shape index: {}]
  %s4 = inlined_call_operand.hbm [shape: f32[3,8,8,8], index: 4, kind: input, shape index: {}]
  %s5 = inlined_call_operand.hbm [shape: f32[8,32], index: 5, kind: input, shape index: {}]
  %s6 = inlined_call_operand.hbm [shape: f32[1,32], index: 6, kind: input, shape index: {}]
  %s7 = inlined_call_operand.vmem [shape: f32[32,32], index: 7, kind: input, shape index: {}]
  %s8 = inlined_call_operand.vmem [shape: f32[1,32], index: 8, kind: input, shape index: {}]
  %s9 = inlined_call_operand.vmem [shape: f32[32,8], index: 9, kind: input, shape index: {}]
  %s10 = inlined_call_operand.vmem [shape: f32[1,8], index: 10, kind: input, shape index: {}]
  %s11 = inlined_call_operand.vmem [shape: f32[8,128], index: 11, kind: output, shape index: {}]
  %s12 = sld [smem:[#allocation0]]
  $region70: #{normalizing_flow_forward.1} parent=0
    _
  %s14 = ssub.s32 1, %s12
  %s15 = scalar_select 0, %s14, %s12
  %16 = sst [smem:[#allocation4]] %s0
  $region1: #{normalizing_flow_forward.1} parent=0
    #allocation5 [shape = 'u8[4096]{0}', space=vmem, size = 0x1000, scoped, tag = 'input window, operand 1, single buffered']
    #allocation6 [shape = 's32[1]{0}', space=sflag, size = 0x4, scoped, tag = 'scoped memory for normalizing_flow_forward.1']
    #allocation7 [shape = 'u8[98304]{0}', space=vmem, size = 0x18000, scoped, tag = 'input window, operand 4, single buffered']
    #allocation8 [shape = 's32[1]{0}', space=sflag, size = 0x4, scoped, tag = 'scoped memory for normalizing_flow_forward.1']
    #allocation9 [shape = 'u8[4096]{0}', space=vmem, size = 0x1000, scoped, tag = 'input window, operand 5, single buffered']
    #allocation10 [shape = 'u8[512]{0}', space=vmem, size = 0x400, scoped, tag = 'input window, operand 6, single buffered']
    #allocation11 [shape = 's32[1]{0}', space=sflag, size = 0x4, scoped, tag = 'scoped memory for normalizing_flow_forward.1']
    %17 = vsyncpa [#allocation6], 0
    %18 = vsyncpa [#allocation8], 0
    %19 = vsyncpa [#allocation11], 0
    // Predicated region
    $region2: #{normalizing_flow_forward.1} parent=1 // pred_check
      _
    $region3: #{normalizing_flow_forward.1} parent=1 // pred_check_branch
      %21 = sbr.rel (0) target = $region5
    $region4: #{normalizing_flow_forward.1} parent=1 // pred_region
      _
    $region5: #{normalizing_flow_forward.1} parent=1 // pred_fallthru
      _
    // Predicated region
    $region6: #{normalizing_flow_forward.1} parent=1 // pred_check
      _
    $region7: #{normalizing_flow_forward.1} parent=1 // pred_check_branch
      %23 = sbr.rel (0) target = $region9
    $region8: #{normalizing_flow_forward.1} parent=1 // pred_region
      %s25 = ssub.s32 128, 128
      %26 = vsyncadd [#allocation6], %s25
      %s28 = sshll.u32 [#allocation5], 4
      %s29 = int_to_ptr.vmem [resolvable:$true] %s28
      %31 = dma.hbm_to_vmem [thread:$0]  %s1, 128, %s29, [#allocation6]
    $region9: #{normalizing_flow_forward.1} parent=1 // pred_fallthru
      _
    // Predicated region
    $region10: #{normalizing_flow_forward.1} parent=1 // pred_check
      _
    $region11: #{normalizing_flow_forward.1} parent=1 // pred_check_branch
      %33 = sbr.rel (0) target = $region13
    $region12: #{normalizing_flow_forward.1} parent=1 // pred_region
      _
    $region13: #{normalizing_flow_forward.1} parent=1 // pred_fallthru
      _
    // Predicated region
    $region14: #{normalizing_flow_forward.1} parent=1 // pred_check
      _
    $region15: #{normalizing_flow_forward.1} parent=1 // pred_check_branch
      %35 = sbr.rel (0) target = $region17
    $region16: #{normalizing_flow_forward.1} parent=1 // pred_region
      _
    $region17: #{normalizing_flow_forward.1} parent=1 // pred_fallthru
      _
    // Predicated region
    $region18: #{normalizing_flow_forward.1} parent=1 // pred_check
      _
    $region19: #{normalizing_flow_forward.1} parent=1 // pred_check_branch
      %37 = sbr.rel (0) target = $region21
    $region20: #{normalizing_flow_forward.1} parent=1 // pred_region
      %s39 = ssub.s32 3072, 3072
      %40 = vsyncadd [#allocation8], %s39
      %s41 = sshll.u32 [#allocation7], 4
      %s42 = int_to_ptr.vmem [resolvable:$true] %s41
      %47 = dma.hbm_to_vmem [thread:$0]  %s4, 3072, %s42, [#allocation8], 128, 128, 8
    $region21: #{normalizing_flow_forward.1} parent=1 // pred_fallthru
      _
    // Predicated region
    $region22: #{normalizing_flow_forward.1} parent=1 // pred_check
      _
    $region23: #{normalizing_flow_forward.1} parent=1 // pred_check_branch
      %49 = sbr.rel (0) target = $region25
    $region24: #{normalizing_flow_forward.1} parent=1 // pred_region
      %s51 = ssub.s32 128, 128
      %52 = vsyncadd [#allocation8], %s51
      %s54 = sshll.u32 [#allocation9], 4
      %s55 = int_to_ptr.vmem [resolvable:$true] %s54
      %57 = dma.hbm_to_vmem [thread:$0]  %s5, 128, %s55, [#allocation8]
    $region25: #{normalizing_flow_forward.1} parent=1 // pred_fallthru
      _
    // Predicated region
    $region26: #{normalizing_flow_forward.1} parent=1 // pred_check
      _
    $region27: #{normalizing_flow_forward.1} parent=1 // pred_check_branch
      %59 = sbr.rel (0) target = $region29
    $region28: #{normalizing_flow_forward.1} parent=1 // pred_region
      %s61 = ssub.s32 16, 16
      %62 = vsyncadd [#allocation11], %s61
      %s64 = sshll.u32 [#allocation10], 4
      %s65 = int_to_ptr.vmem [resolvable:$true] %s64
      %67 = dma.hbm_to_vmem [thread:$0]  %s6, 16, %s65, [#allocation11]
    $region29: #{normalizing_flow_forward.1} parent=1 // pred_fallthru
      _
    // Predicated region
    $region30: #{normalizing_flow_forward.1} parent=1 // pred_check
      _
    $region31: #{normalizing_flow_forward.1} parent=1 // pred_check_branch
      %69 = sbr.rel (0) target = $region33
    $region32: #{normalizing_flow_forward.1} parent=1 // pred_region
      _
    $region33: #{normalizing_flow_forward.1} parent=1 // pred_fallthru
      _
    // Predicated region
    $region34: #{normalizing_flow_forward.1} parent=1 // pred_check
      _
    $region35: #{normalizing_flow_forward.1} parent=1 // pred_check_branch
      %71 = sbr.rel (0) target = $region37
    $region36: #{normalizing_flow_forward.1} parent=1 // pred_region
      _
    $region37: #{normalizing_flow_forward.1} parent=1 // pred_fallthru
      _
    // Predicated region
    $region38: #{normalizing_flow_forward.1} parent=1 // pred_check
      _
    $region39: #{normalizing_flow_forward.1} parent=1 // pred_check_branch
      %73 = sbr.rel (0) target = $region41
    $region40: #{normalizing_flow_forward.1} parent=1 // pred_region
      _
    $region41: #{normalizing_flow_forward.1} parent=1 // pred_fallthru
      _
    // Predicated region
    $region42: #{normalizing_flow_forward.1} parent=1 // pred_check
      _
    $region43: #{normalizing_flow_forward.1} parent=1 // pred_check_branch
      %75 = sbr.rel (0) target = $region45
    $region44: #{normalizing_flow_forward.1} parent=1 // pred_region
      _
    $region45: #{normalizing_flow_forward.1} parent=1 // pred_fallthru
      _
    // Predicated region
    $region46: #{normalizing_flow_forward.1} parent=1 // pred_check
      _
    $region47: #{normalizing_flow_forward.1} parent=1 // pred_check_branch
      %77 = sbr.rel (0) target = $region49
    $region48: #{normalizing_flow_forward.1} parent=1 // pred_region
      %78 = dma.done [#allocation6], 128
    $region49: #{normalizing_flow_forward.1} parent=1 // pred_fallthru
      _
    // Predicated region
    $region50: #{normalizing_flow_forward.1} parent=1 // pred_check
      _
    $region51: #{normalizing_flow_forward.1} parent=1 // pred_check_branch
      %80 = sbr.rel (0) target = $region53
    $region52: #{normalizing_flow_forward.1} parent=1 // pred_region
      %81 = dma.done [#allocation8], 3072
    $region53: #{normalizing_flow_forward.1} parent=1 // pred_fallthru
      _
    // Predicated region
    $region54: #{normalizing_flow_forward.1} parent=1 // pred_check
      _
    $region55: #{normalizing_flow_forward.1} parent=1 // pred_check_branch
      %83 = sbr.rel (0) target = $region57
    $region56: #{normalizing_flow_forward.1} parent=1 // pred_region
      %84 = dma.done [#allocation8], 128
    $region57: #{normalizing_flow_forward.1} parent=1 // pred_fallthru
      _
    // Predicated region
    $region58: #{normalizing_flow_forward.1} parent=1 // pred_check
      _
    $region59: #{normalizing_flow_forward.1} parent=1 // pred_check_branch
      %86 = sbr.rel (0) target = $region61
    $region60: #{normalizing_flow_forward.1} parent=1 // pred_region
      %87 = dma.done [#allocation11], 16
    $region61: #{normalizing_flow_forward.1} parent=1 // pred_fallthru
      _
    %v88 = vld [vmem:[%s2] sm:$0xff]
    %90 = vrot.lane.b32.xlu0 %v88, 4
    %v91 = vpop.permute.xlu0 %90
    %vm93 = vcmask 56352
    %94 = vst.msk [vmem:[#allocation2] sm:$0xff] %vm93, %v91
    %s95 = sld [smem:[#allocation4]]
    %v96 = vstv %s95
    %vm97 = vcmask 64568
    %98 = vst.msk [vmem:[#allocation2] sm:$0xff] %vm97, %v96
    %v99 = vld [vmem:[#allocation5] sm:$0xff]
    %vm100 = vcmask 31744
    %101 = vst.msk [vmem:[#allocation2] sm:$0xff] %vm100, %v99
    %v102 = vld [vmem:[#allocation2] sm:$0xff]
    %v103 = vld [vmem:[%s3] sm:$0xff]
    %v104 = vadd.f32 %v102, %v103
    %vm105 = vcmask 64512
    %v106 = vsel %vm105, %v104, 0.0
    %107 = vadd.xlane.f32.xlu0 %v106
    %v108 = vpop.xlane.xlu0 %107
    %v109 = vrot.slane %v108, 4
    %v110 = vadd.f32 %v108, %v109
    %v111 = vrot.slane %v110, 2
    %v112 = vadd.f32 %v110, %v111
    %v113 = vrot.slane %v112, 1
    %v114 = vadd.f32 %v112, %v113
    %s115 = vtos %v114
    %v116 = vrcp.pop 64.0
    %s117 = vtos %v116
    %s118 = smul.f32 %s115, %s117
    %v119 = vstv %s118
    %v120 = vsub.f32 %v104, %v119
    %v121 = vmul.f32 %v120, %v120
    %v122 = vsel %vm105, %v121, 0.0
    %123 = vadd.xlane.f32.xlu0 %v122
    %v124 = vpop.xlane.xlu0 %123
    %v125 = vrot.slane %v124, 4
    %v126 = vadd.f32 %v124, %v125
    %v127 = vrot.slane %v126, 2
    %v128 = vadd.f32 %v126, %v127
    %v129 = vrot.slane %v128, 1
    %v130 = vadd.f32 %v128, %v129
    %s131 = vtos %v130
    %v132 = vrcp.pop 63.0
    %s133 = vtos %v132
    %s134 = smul.f32 %s131, %s133
    %v135 = vstv %s134
    %v136 = vrsqrt.pop %v135
    %s137 = vtos %v136
    %v138 = vstv %s137
    %v139 = vmul.f32 %v120, %v138
    %v140 = vld [vmem:[#allocation9] sm:$0xff]
    %v141 = vld [vmem:[#allocation10] sm:$0x1]
    %v143 = vlaneseq
    %v144 = vshrl.u32 %v143, 7
    %v145 = vsub.s32 0, %v144
    %v146 = vrot.slane %v141, %v145
    %v149 = vsel %vm105, %v139, 0
    %151 = vmatprep.subr.mxu0 0.0
    %152 = vmatpush1.msra.mxu0 0.0
    %153 = vmatprep.subr.mxu0 0.0
    %154 = vmatpush1.msra.mxu0 0.0
    %155 = vmatprep.subr.mxu0 0.0
    %156 = vmatpush1.msra.mxu0 0.0
    %157 = vmatprep.subr.mxu0 0.0
    %158 = vmatpush1.msra.mxu0 0.0
    %159 = vmatprep.subr.mxu0 0.0
    %160 = vmatpush1.msra.mxu0 0.0
    %161 = vmatprep.subr.mxu0 0.0
    %162 = vmatpush1.msra.mxu0 0.0
    %163 = vmatprep.subr.mxu0 0.0
    %164 = vmatpush1.msra.mxu0 0.0
    %165 = vmatprep.subr.mxu0 0.0
    %166 = vmatpush1.msra.mxu0 0.0
    %167 = vmatprep.subr.mxu0 0.0
    %168 = vmatpush1.msra.mxu0 0.0
    %169 = vmatprep.subr.mxu0 0.0
    %170 = vmatpush1.msra.mxu0 0.0
    %171 = vmatprep.subr.mxu0 0.0
    %172 = vmatpush1.msra.mxu0 0.0
    %173 = vmatprep.subr.mxu0 0.0
    %174 = vmatpush1.msra.mxu0 0.0
    %175 = vmatprep.subr.mxu0 0.0
    %176 = vmatpush1.msra.mxu0 0.0
    %177 = vmatprep.subr.mxu0 0.0
    %178 = vmatpush1.msra.mxu0 0.0
    %179 = vmatprep.subr.mxu0 0.0
    %180 = vmatpush1.msra.mxu0 0.0
    %181 = vmatprep.subr.mxu0 0.0
    %182 = vmatpush1.msra.mxu0 %v140
    %183 = vmatprep.subr.mxu0 0.0
    %184 = vmatpush2.msra.mxu0 0.0
    %185 = vmatprep.subr.mxu0 0.0
    %186 = vmatpush2.msra.mxu0 0.0
    %187 = vmatprep.subr.mxu0 0.0
    %188 = vmatpush2.msra.mxu0 0.0
    %189 = vmatprep.subr.mxu0 0.0
    %190 = vmatpush2.msra.mxu0 0.0
    %191 = vmatprep.subr.mxu0 0.0
    %192 = vmatpush2.msra.mxu0 0.0
    %193 = vmatprep.subr.mxu0 0.0
    %194 = vmatpush2.msra.mxu0 0.0
    %195 = vmatprep.subr.mxu0 0.0
    %196 = vmatpush2.msra.mxu0 0.0
    %197 = vmatprep.subr.mxu0 0.0
    %198 = vmatpush2.msra.mxu0 0.0
    %199 = vmatprep.subr.mxu0 0.0
    %200 = vmatpush2.msra.mxu0 0.0
    %201 = vmatprep.subr.mxu0 0.0
    %202 = vmatpush2.msra.mxu0 0.0
    %203 = vmatprep.subr.mxu0 0.0
    %204 = vmatpush2.msra.mxu0 0.0
    %205 = vmatprep.subr.mxu0 0.0
    %206 = vmatpush2.msra.mxu0 0.0
    %207 = vmatprep.subr.mxu0 0.0
    %208 = vmatpush2.msra.mxu0 0.0
    %209 = vmatprep.subr.mxu0 0.0
    %210 = vmatpush2.msra.mxu0 0.0
    %211 = vmatprep.subr.mxu0 0.0
    %212 = vmatpush2.msra.mxu0 0.0
    %213 = vmatprep.subr.mxu0 0.0
    %214 = vmatpush2.msra.mxu0 0.0
    %215 = vmatprep.mubr.f32.mxu0 0.0
    %216 = vmatmul.mubr.f32.gmra.mxu0 %v149
    %v217 = vpop.f32.mrf.mxu0
    %v218 = vadd.f32 %v146, %v217
    %v219 = vpop.f32.mrf.mxu0
    %220 = vdwg.mxu0
    %vm221 = vcmask 261120
    %v222 = vsel %vm221, %v218, 0.0
    %v223 = vrot.slane %v222, 4
    %v224 = vadd.f32 %v222, %v223
    %v225 = vrot.slane %v224, 2
    %v226 = vadd.f32 %v224, %v225
    %v227 = vrot.slane %v226, 1
    %v228 = vadd.f32 %v226, %v227
    %v229 = vrcp.pop 8.0
    %v230 = vmul.f32 %v228, %v229
    %v231 = vsub.f32 %v218, %v230
    %v232 = vmul.f32 %v231, %v231
    %v233 = vsel %vm221, %v232, 0.0
    %v234 = vrot.slane %v233, 4
    %v235 = vadd.f32 %v233, %v234
    %v236 = vrot.slane %v235, 2
    %v237 = vadd.f32 %v235, %v236
    %v238 = vrot.slane %v237, 1
    %v239 = vadd.f32 %v237, %v238
    %v240 = vmul.f32 %v239, %v229
    %v241 = vadd.f32 %v240, 1e-05
    %v242 = vrsqrt.pop %v241
    %v243 = vmul.f32 %v231, %v242
    %v244 = vmax.f32 %v243, 0.0
    %v245 = vld [vmem:[%s7] sm:$0xff]
    %v246 = vld [vmem:[%s7 + $0x8] sm:$0xff]
    %v247 = vld [vmem:[%s7 + $0x10] sm:$0xff]
    %v248 = vld [vmem:[%s7 + $0x18] sm:$0xff]
    %v249 = vld [vmem:[%s8] sm:$0x1]
    %v251 = vlaneseq
    %v252 = vshrl.u32 %v251, 7
    %v253 = vsub.s32 0, %v252
    %v254 = vrot.slane %v249, %v253
    %v257 = vsel %vm221, %v244, 0
    %259 = vmatprep.subr.mxu0 0.0
    %260 = vmatpush1.msra.mxu0 0.0
    %261 = vmatprep.subr.mxu0 0.0
    %262 = vmatpush1.msra.mxu0 0.0
    %263 = vmatprep.subr.mxu0 0.0
    %264 = vmatpush1.msra.mxu0 0.0
    %265 = vmatprep.subr.mxu0 0.0
    %266 = vmatpush1.msra.mxu0 0.0
    %267 = vmatprep.subr.mxu0 0.0
    %268 = vmatpush1.msra.mxu0 0.0
    %269 = vmatprep.subr.mxu0 0.0
    %270 = vmatpush1.msra.mxu0 0.0
    %271 = vmatprep.subr.mxu0 0.0
    %272 = vmatpush1.msra.mxu0 0.0
    %273 = vmatprep.subr.mxu0 0.0
    %274 = vmatpush1.msra.mxu0 0.0
    %275 = vmatprep.subr.mxu0 0.0
    %276 = vmatpush1.msra.mxu0 0.0
    %277 = vmatprep.subr.mxu0 0.0
    %278 = vmatpush1.msra.mxu0 0.0
    %279 = vmatprep.subr.mxu0 0.0
    %280 = vmatpush1.msra.mxu0 0.0
    %281 = vmatprep.subr.mxu0 0.0
    %282 = vmatpush1.msra.mxu0 0.0
    %283 = vmatprep.subr.mxu0 0.0
    %284 = vmatpush1.msra.mxu0 %v248
    %285 = vmatprep.subr.mxu0 0.0
    %286 = vmatpush1.msra.mxu0 %v247
    %287 = vmatprep.subr.mxu0 0.0
    %288 = vmatpush1.msra.mxu0 %v246
    %289 = vmatprep.subr.mxu0 0.0
    %290 = vmatpush1.msra.mxu0 %v245
    %291 = vmatprep.subr.mxu0 0.0
    %292 = vmatpush2.msra.mxu0 0.0
    %293 = vmatprep.subr.mxu0 0.0
    %294 = vmatpush2.msra.mxu0 0.0
    %295 = vmatprep.subr.mxu0 0.0
    %296 = vmatpush2.msra.mxu0 0.0
    %297 = vmatprep.subr.mxu0 0.0
    %298 = vmatpush2.msra.mxu0 0.0
    %299 = vmatprep.subr.mxu0 0.0
    %300 = vmatpush2.msra.mxu0 0.0
    %301 = vmatprep.subr.mxu0 0.0
    %302 = vmatpush2.msra.mxu0 0.0
    %303 = vmatprep.subr.mxu0 0.0
    %304 = vmatpush2.msra.mxu0 0.0
    %305 = vmatprep.subr.mxu0 0.0
    %306 = vmatpush2.msra.mxu0 0.0
    %307 = vmatprep.subr.mxu0 0.0
    %308 = vmatpush2.msra.mxu0 0.0
    %309 = vmatprep.subr.mxu0 0.0
    %310 = vmatpush2.msra.mxu0 0.0
    %311 = vmatprep.subr.mxu0 0.0
    %312 = vmatpush2.msra.mxu0 0.0
    %313 = vmatprep.subr.mxu0 0.0
    %314 = vmatpush2.msra.mxu0 0.0
    %315 = vmatprep.subr.mxu0 0.0
    %316 = vmatpush2.msra.mxu0 0.0
    %317 = vmatprep.subr.mxu0 0.0
    %318 = vmatpush2.msra.mxu0 0.0
    %319 = vmatprep.subr.mxu0 0.0
    %320 = vmatpush2.msra.mxu0 0.0
    %321 = vmatprep.subr.mxu0 0.0
    %322 = vmatpush2.msra.mxu0 0.0
    %323 = vmatprep.mubr.f32.mxu0 0.0
    %324 = vmatmul.mubr.f32.gmra.mxu0 %v257
    %v325 = vpop.f32.mrf.mxu0
    %v326 = vadd.f32 %v254, %v325
    %v327 = vpop.f32.mrf.mxu0
    %328 = vdwg.mxu0
    %v329 = vsel %vm221, %v326, 0.0
    %v330 = vrot.slane %v329, 4
    %v331 = vadd.f32 %v329, %v330
    %v332 = vrot.slane %v331, 2
    %v333 = vadd.f32 %v331, %v332
    %v334 = vrot.slane %v333, 1
    %v335 = vadd.f32 %v333, %v334
    %v336 = vmul.f32 %v335, %v229
    %v337 = vsub.f32 %v326, %v336
    %v338 = vmul.f32 %v337, %v337
    %v339 = vsel %vm221, %v338, 0.0
    %v340 = vrot.slane %v339, 4
    %v341 = vadd.f32 %v339, %v340
    %v342 = vrot.slane %v341, 2
    %v343 = vadd.f32 %v341, %v342
    %v344 = vrot.slane %v343, 1
    %v345 = vadd.f32 %v343, %v344
    %v346 = vmul.f32 %v345, %v229
    %v347 = vadd.f32 %v346, 1e-05
    %v348 = vrsqrt.pop %v347
    %v349 = vmul.f32 %v337, %v348
    %v350 = vmax.f32 %v349, 0.0
    %v351 = vld [vmem:[%s9] sm:$0xff]
    %v352 = vld [vmem:[%s9 + $0x8] sm:$0xff]
    %v353 = vld [vmem:[%s9 + $0x10] sm:$0xff]
    %v354 = vld [vmem:[%s9 + $0x18] sm:$0xff]
    %v355 = vld [vmem:[%s10] sm:$0x1]
    %v357 = vlaneseq
    %v358 = vshrl.u32 %v357, 7
    %v359 = vsub.s32 0, %v358
    %v360 = vrot.slane %v355, %v359
    %v363 = vsel %vm221, %v350, 0
    %365 = vmatprep.subr.mxu0 0.0
    %366 = vmatpush1.msra.mxu0 0.0
    %367 = vmatprep.subr.mxu0 0.0
    %368 = vmatpush1.msra.mxu0 0.0
    %369 = vmatprep.subr.mxu0 0.0
    %370 = vmatpush1.msra.mxu0 0.0
    %371 = vmatprep.subr.mxu0 0.0
    %372 = vmatpush1.msra.mxu0 0.0
    %373 = vmatprep.subr.mxu0 0.0
    %374 = vmatpush1.msra.mxu0 0.0
    %375 = vmatprep.subr.mxu0 0.0
    %376 = vmatpush1.msra.mxu0 0.0
    %377 = vmatprep.subr.mxu0 0.0
    %378 = vmatpush1.msra.mxu0 0.0
    %379 = vmatprep.subr.mxu0 0.0
    %380 = vmatpush1.msra.mxu0 0.0
    %381 = vmatprep.subr.mxu0 0.0
    %382 = vmatpush1.msra.mxu0 0.0
    %383 = vmatprep.subr.mxu0 0.0
    %384 = vmatpush1.msra.mxu0 0.0
    %385 = vmatprep.subr.mxu0 0.0
    %386 = vmatpush1.msra.mxu0 0.0
    %387 = vmatprep.subr.mxu0 0.0
    %388 = vmatpush1.msra.mxu0 0.0
    %389 = vmatprep.subr.mxu0 0.0
    %390 = vmatpush1.msra.mxu0 %v354
    %391 = vmatprep.subr.mxu0 0.0
    %392 = vmatpush1.msra.mxu0 %v353
    %393 = vmatprep.subr.mxu0 0.0
    %394 = vmatpush1.msra.mxu0 %v352
    %395 = vmatprep.subr.mxu0 0.0
    %396 = vmatpush1.msra.mxu0 %v351
    %397 = vmatprep.subr.mxu0 0.0
    %398 = vmatpush2.msra.mxu0 0.0
    %399 = vmatprep.subr.mxu0 0.0
    %400 = vmatpush2.msra.mxu0 0.0
    %401 = vmatprep.subr.mxu0 0.0
    %402 = vmatpush2.msra.mxu0 0.0
    %403 = vmatprep.subr.mxu0 0.0
    %404 = vmatpush2.msra.mxu0 0.0
    %405 = vmatprep.subr.mxu0 0.0
    %406 = vmatpush2.msra.mxu0 0.0
    %407 = vmatprep.subr.mxu0 0.0
    %408 = vmatpush2.msra.mxu0 0.0
    %409 = vmatprep.subr.mxu0 0.0
    %410 = vmatpush2.msra.mxu0 0.0
    %411 = vmatprep.subr.mxu0 0.0
    %412 = vmatpush2.msra.mxu0 0.0
    %413 = vmatprep.subr.mxu0 0.0
    %414 = vmatpush2.msra.mxu0 0.0
    %415 = vmatprep.subr.mxu0 0.0
    %416 = vmatpush2.msra.mxu0 0.0
    %417 = vmatprep.subr.mxu0 0.0
    %418 = vmatpush2.msra.mxu0 0.0
    %419 = vmatprep.subr.mxu0 0.0
    %420 = vmatpush2.msra.mxu0 0.0
    %421 = vmatprep.subr.mxu0 0.0
    %422 = vmatpush2.msra.mxu0 0.0
    %423 = vmatprep.subr.mxu0 0.0
    %424 = vmatpush2.msra.mxu0 0.0
    %425 = vmatprep.subr.mxu0 0.0
    %426 = vmatpush2.msra.mxu0 0.0
    %427 = vmatprep.subr.mxu0 0.0
    %428 = vmatpush2.msra.mxu0 0.0
    %429 = vmatprep.mubr.f32.mxu0 0.0
    %430 = vmatmul.mubr.f32.gmra.mxu0 %v363
    %v431 = vpop.f32.mrf.mxu0
    %v432 = vadd.f32 %v360, %v431
    %v433 = vpop.f32.mrf.mxu0
    %434 = vdwg.mxu0
    %v435 = vsub.f32 %v99, %v119
    %v436 = vmul.f32 %v435, %v138
    %v437 = vmul.f32 %v432, 1.442695
    %v438 = vpow.pop %v437
    %440 = vrot.lane.b32.xlu0 %v438, 4
    %v441 = vpop.permute.xlu0 %440
    %v443 = vmul.f32 %v436, %v441
    %v444 = vadd.f32 %v443, %v432
    %v445 = vand.u32 2147483647, %v432
    %v446 = vadd.f32 %v445, 1e-09
    %v447 = vlog2.pop %v446
    %v448 = vmul.f32 %v447, 0.6931472
    %v449 = vsel %vm100, %v448, 0.0
    %450 = vadd.xlane.f32.xlu0 %v449
    %v451 = vpop.xlane.xlu0 %450
    %v452 = vrcp.pop 4.0
    %v453 = vmul.f32 %v451, %v452
    %v454 = vadd.f32 %v453, 0.0
    %455 = vst.msk [vmem:[#allocation3] sm:$0xff] %vm100, %v99
    %vm456 = vcmask 64544
    %457 = vst.msk [vmem:[#allocation3] sm:$0xff] %vm456, %v444
    %v458 = vld [vmem:[#allocation3] sm:$0xff]
    %v459 = vld [vmem:[#allocation7] sm:$0xff]
    %v460 = vld [vmem:[#allocation7 + $0x8] sm:$0xff]
    %v461 = vld [vmem:[#allocation7 + $0x10] sm:$0xff]
    %v462 = vld [vmem:[#allocation7 + $0x18] sm:$0xff]
    %v463 = vld [vmem:[#allocation7 + $0x20] sm:$0xff]
    %v464 = vld [vmem:[#allocation7 + $0x28] sm:$0xff]
    %v465 = vld [vmem:[#allocation7 + $0x30] sm:$0xff]
    %v466 = vld [vmem:[#allocation7 + $0x38] sm:$0xff]
    %v468 = vcombine.high %v458, %v458
    %v470 = vunpack.c.l.s4 1966171168
    %v471 = vunpack.c.0.s8 %v470
    %v472 = vlaneseq
    %v473 = vshrl.u32 %v472, 7
    %v474 = vsub.s32 %v471, %v473
    %v475 = vrot.slane %v458, %v474
    %v477 = vunpack.c.l.s4 1966171168
    %v478 = vunpack.c.0.s8 %v477
    %v479 = vlaneseq
    %v480 = vshrl.u32 %v479, 7
    %v481 = vsub.s32 %v478, %v480
    %v482 = vrot.slane %v468, %v481
    %v483 = vcombine.high %v475, %v475
    %v484 = vcombine.high %v482, %v482
    %v486 = vunpack.c.l.s4 1966171168
    %v487 = vunpack.c.0.s8 %v486
    %v488 = vlaneseq
    %v489 = vshrl.u32 %v488, 7
    %v490 = vsub.s32 %v487, %v489
    %v491 = vrot.slane %v475, %v490
    %v493 = vunpack.c.l.s4 1966171168
    %v494 = vunpack.c.0.s8 %v493
    %v495 = vlaneseq
    %v496 = vshrl.u32 %v495, 7
    %v497 = vsub.s32 %v494, %v496
    %v498 = vrot.slane %v482, %v497
    %v500 = vunpack.c.l.s4 1966171168
    %v501 = vunpack.c.0.s8 %v500
    %v502 = vlaneseq
    %v503 = vshrl.u32 %v502, 7
    %v504 = vsub.s32 %v501, %v503
    %v505 = vrot.slane %v483, %v504
    %v507 = vunpack.c.l.s4 1966171168
    %v508 = vunpack.c.0.s8 %v507
    %v509 = vlaneseq
    %v510 = vshrl.u32 %v509, 7
    %v511 = vsub.s32 %v508, %v510
    %v512 = vrot.slane %v484, %v511
    %v513 = vcombine.high %v491, %v491
    %v514 = vcombine.high %v498, %v498
    %v515 = vcombine.high %v505, %v505
    %v516 = vcombine.high %v512, %v512
    %v517 = vlaneseq
    %v518 = vshrl.u32 %v517, 7
    %v519 = vsub.s32 0, %v518
    %v520 = vrot.slane %v491, %v519
    %v521 = vlaneseq
    %v522 = vshrl.u32 %v521, 7
    %v523 = vsub.s32 0, %v522
    %v524 = vrot.slane %v505, %v523
    %v525 = vlaneseq
    %v526 = vshrl.u32 %v525, 7
    %v527 = vsub.s32 0, %v526
    %v528 = vrot.slane %v513, %v527
    %v529 = vlaneseq
    %v530 = vshrl.u32 %v529, 7
    %v531 = vsub.s32 0, %v530
    %v532 = vrot.slane %v515, %v531
    %v533 = vlaneseq
    %v534 = vshrl.u32 %v533, 7
    %v535 = vsub.s32 0, %v534
    %v536 = vrot.slane %v498, %v535
    %v537 = vlaneseq
    %v538 = vshrl.u32 %v537, 7
    %v539 = vsub.s32 0, %v538
    %v540 = vrot.slane %v512, %v539
    %v541 = vlaneseq
    %v542 = vshrl.u32 %v541, 7
    %v543 = vsub.s32 0, %v542
    %v544 = vrot.slane %v514, %v543
    %v545 = vlaneseq
    %v546 = vshrl.u32 %v545, 7
    %v547 = vsub.s32 0, %v546
    %v548 = vrot.slane %v516, %v547
    %v557 = vmul.f32 %v459, %v520
    %v558 = vmul.f32 %v460, %v524
    %v559 = vmul.f32 %v461, %v528
    %v560 = vmul.f32 %v462, %v532
    %v561 = vmul.f32 %v463, %v536
    %v562 = vmul.f32 %v464, %v540
    %v563 = vmul.f32 %v465, %v544
    %v564 = vmul.f32 %v466, %v548
    %v565 = vsel %vm105, %v557, 0.0
    %566 = vadd.xlane.f32.xlu0 %v565
    %v567 = vpop.xlane.xlu0 %566
    %v568 = vsel %vm105, %v558, 0.0
    %569 = vadd.xlane.f32.xlu0 %v568
    %v570 = vpop.xlane.xlu0 %569
    %v571 = vsel %vm105, %v559, 0.0
    %572 = vadd.xlane.f32.xlu0 %v571
    %v573 = vpop.xlane.xlu0 %572
    %v574 = vsel %vm105, %v560, 0.0
    %575 = vadd.xlane.f32.xlu0 %v574
    %v576 = vpop.xlane.xlu0 %575
    %v577 = vsel %vm105, %v561, 0.0
    %578 = vadd.xlane.f32.xlu0 %v577
    %v579 = vpop.xlane.xlu0 %578
    %v580 = vsel %vm105, %v562, 0.0
    %581 = vadd.xlane.f32.xlu0 %v580
    %v582 = vpop.xlane.xlu0 %581
    %v583 = vsel %vm105, %v563, 0.0
    %584 = vadd.xlane.f32.xlu0 %v583
    %v585 = vpop.xlane.xlu0 %584
    %v586 = vsel %vm105, %v564, 0.0
    %587 = vadd.xlane.f32.xlu0 %v586
    %v588 = vpop.xlane.xlu0 %587
    %v597 = vlaneseq
    %v598 = vand.u32 %v597, 127
    %v599 = vlaneseq
    %v600 = vshrl.u32 %v599, 7
    %v601 = vsub.s32 %v598, %v600
    %v602 = vrot.slane %v567, %v601
    %v603 = vlaneseq
    %v604 = vshrl.u32 %v603, 7
    %v605 = vsub.s32 %v598, %v604
    %v606 = vrot.slane %v570, %v605
    %v607 = vlaneseq
    %v608 = vshrl.u32 %v607, 7
    %v609 = vsub.s32 %v598, %v608
    %v610 = vrot.slane %v573, %v609
    %v611 = vlaneseq
    %v612 = vshrl.u32 %v611, 7
    %v613 = vsub.s32 %v598, %v612
    %v614 = vrot.slane %v576, %v613
    %v615 = vlaneseq
    %v616 = vshrl.u32 %v615, 7
    %v617 = vsub.s32 %v598, %v616
    %v618 = vrot.slane %v579, %v617
    %v619 = vlaneseq
    %v620 = vshrl.u32 %v619, 7
    %v621 = vsub.s32 %v598, %v620
    %v622 = vrot.slane %v582, %v621
    %v623 = vlaneseq
    %v624 = vshrl.u32 %v623, 7
    %v625 = vsub.s32 %v598, %v624
    %v626 = vrot.slane %v585, %v625
    %v627 = vlaneseq
    %v628 = vshrl.u32 %v627, 7
    %v629 = vsub.s32 %v598, %v628
    %v630 = vrot.slane %v588, %v629
    %vm631 = vcmask 1041409
    %v632 = vsel %vm631, %v606, %v602
    %vm633 = vcmask 1042434
    %v634 = vsel %vm633, %v610, %v632
    %vm635 = vcmask 1043459
    %v636 = vsel %vm635, %v614, %v634
    %vm637 = vcmask 1044484
    %v638 = vsel %vm637, %v618, %v636
    %vm639 = vcmask 1045509
    %v640 = vsel %vm639, %v622, %v638
    %vm641 = vcmask 1046534
    %v642 = vsel %vm641, %v626, %v640
    %vm643 = vcmask 1047559
    %v644 = vsel %vm643, %v630, %v642
    %646 = vst.msk [vmem:[#allocation2] sm:$0xff] %vm100, %v644
    %v647 = vld [vmem:[#allocation2] sm:$0xff]
    %s648 = scalar_lea.vmem %s3, 8
    %v649 = vld [vmem:[%s648] sm:$0xff]
    %v650 = vadd.f32 %v647, %v649
    %v651 = vsel %vm105, %v650, 0.0
    %652 = vadd.xlane.f32.xlu0 %v651
    %v653 = vpop.xlane.xlu0 %652
    %v654 = vrot.slane %v653, 4
    %v655 = vadd.f32 %v653, %v654
    %v656 = vrot.slane %v655, 2
    %v657 = vadd.f32 %v655, %v656
    %v658 = vrot.slane %v657, 1
    %v659 = vadd.f32 %v657, %v658
    %s660 = vtos %v659
    %v661 = vrcp.pop 64.0
    %s662 = vtos %v661
    %s663 = smul.f32 %s660, %s662
    %v664 = vstv %s663
    %v665 = vsub.f32 %v650, %v664
    %v666 = vmul.f32 %v665, %v665
    %v667 = vsel %vm105, %v666, 0.0
    %668 = vadd.xlane.f32.xlu0 %v667
    %v669 = vpop.xlane.xlu0 %668
    %v670 = vrot.slane %v669, 4
    %v671 = vadd.f32 %v669, %v670
    %v672 = vrot.slane %v671, 2
    %v673 = vadd.f32 %v671, %v672
    %v674 = vrot.slane %v673, 1
    %v675 = vadd.f32 %v673, %v674
    %s676 = vtos %v675
    %v677 = vrcp.pop 63.0
    %s678 = vtos %v677
    %s679 = smul.f32 %s676, %s678
    %v680 = vstv %s679
    %v681 = vrsqrt.pop %v680
    %s682 = vtos %v681
    %v683 = vstv %s682
    %v684 = vmul.f32 %v665, %v683
    %v685 = vld [vmem:[#allocation9] sm:$0xff]
    %v686 = vld [vmem:[#allocation10] sm:$0x1]
    %v688 = vlaneseq
    %v689 = vshrl.u32 %v688, 7
    %v690 = vsub.s32 0, %v689
    %v691 = vrot.slane %v686, %v690
    %v694 = vsel %vm105, %v684, 0
    %696 = vmatprep.subr.mxu0 0.0
    %697 = vmatpush1.msra.mxu0 0.0
    %698 = vmatprep.subr.mxu0 0.0
    %699 = vmatpush1.msra.mxu0 0.0
    %700 = vmatprep.subr.mxu0 0.0
    %701 = vmatpush1.msra.mxu0 0.0
    %702 = vmatprep.subr.mxu0 0.0
    %703 = vmatpush1.msra.mxu0 0.0
    %704 = vmatprep.subr.mxu0 0.0
    %705 = vmatpush1.msra.mxu0 0.0
    %706 = vmatprep.subr.mxu0 0.0
    %707 = vmatpush1.msra.mxu0 0.0
    %708 = vmatprep.subr.mxu0 0.0
    %709 = vmatpush1.msra.mxu0 0.0
    %710 = vmatprep.subr.mxu0 0.0
    %711 = vmatpush1.msra.mxu0 0.0
    %712 = vmatprep.subr.mxu0 0.0
    %713 = vmatpush1.msra.mxu0 0.0
    %714 = vmatprep.subr.mxu0 0.0
    %715 = vmatpush1.msra.mxu0 0.0
    %716 = vmatprep.subr.mxu0 0.0
    %717 = vmatpush1.msra.mxu0 0.0
    %718 = vmatprep.subr.mxu0 0.0
    %719 = vmatpush1.msra.mxu0 0.0
    %720 = vmatprep.subr.mxu0 0.0
    %721 = vmatpush1.msra.mxu0 0.0
    %722 = vmatprep.subr.mxu0 0.0
    %723 = vmatpush1.msra.mxu0 0.0
    %724 = vmatprep.subr.mxu0 0.0
    %725 = vmatpush1.msra.mxu0 0.0
    %726 = vmatprep.subr.mxu0 0.0
    %727 = vmatpush1.msra.mxu0 %v685
    %728 = vmatprep.subr.mxu0 0.0
    %729 = vmatpush2.msra.mxu0 0.0
    %730 = vmatprep.subr.mxu0 0.0
    %731 = vmatpush2.msra.mxu0 0.0
    %732 = vmatprep.subr.mxu0 0.0
    %733 = vmatpush2.msra.mxu0 0.0
    %734 = vmatprep.subr.mxu0 0.0
    %735 = vmatpush2.msra.mxu0 0.0
    %736 = vmatprep.subr.mxu0 0.0
    %737 = vmatpush2.msra.mxu0 0.0
    %738 = vmatprep.subr.mxu0 0.0
    %739 = vmatpush2.msra.mxu0 0.0
    %740 = vmatprep.subr.mxu0 0.0
    %741 = vmatpush2.msra.mxu0 0.0
    %742 = vmatprep.subr.mxu0 0.0
    %743 = vmatpush2.msra.mxu0 0.0
    %744 = vmatprep.subr.mxu0 0.0
    %745 = vmatpush2.msra.mxu0 0.0
    %746 = vmatprep.subr.mxu0 0.0
    %747 = vmatpush2.msra.mxu0 0.0
    %748 = vmatprep.subr.mxu0 0.0
    %749 = vmatpush2.msra.mxu0 0.0
    %750 = vmatprep.subr.mxu0 0.0
    %751 = vmatpush2.msra.mxu0 0.0
    %752 = vmatprep.subr.mxu0 0.0
    %753 = vmatpush2.msra.mxu0 0.0
    %754 = vmatprep.subr.mxu0 0.0
    %755 = vmatpush2.msra.mxu0 0.0
    %756 = vmatprep.subr.mxu0 0.0
    %757 = vmatpush2.msra.mxu0 0.0
    %758 = vmatprep.subr.mxu0 0.0
    %759 = vmatpush2.msra.mxu0 0.0
    %760 = vmatprep.mubr.f32.mxu0 0.0
    %761 = vmatmul.mubr.f32.gmra.mxu0 %v694
    %v762 = vpop.f32.mrf.mxu0
    %v763 = vadd.f32 %v691, %v762
    %v764 = vpop.f32.mrf.mxu0
    %765 = vdwg.mxu0
    %v766 = vsel %vm221, %v763, 0.0
    %v767 = vrot.slane %v766, 4
    %v768 = vadd.f32 %v766, %v767
    %v769 = vrot.slane %v768, 2
    %v770 = vadd.f32 %v768, %v769
    %v771 = vrot.slane %v770, 1
    %v772 = vadd.f32 %v770, %v771
    %v773 = vmul.f32 %v772, %v229
    %v774 = vsub.f32 %v763, %v773
    %v775 = vmul.f32 %v774, %v774
    %v776 = vsel %vm221, %v775, 0.0
    %v777 = vrot.slane %v776, 4
    %v778 = vadd.f32 %v776, %v777
    %v779 = vrot.slane %v778, 2
    %v780 = vadd.f32 %v778, %v779
    %v781 = vrot.slane %v780, 1
    %v782 = vadd.f32 %v780, %v781
    %v783 = vmul.f32 %v782, %v229
    %v784 = vadd.f32 %v783, 1e-05
    %v785 = vrsqrt.pop %v784
    %v786 = vmul.f32 %v774, %v785
    %v787 = vmax.f32 %v786, 0.0
    %v788 = vld [vmem:[%s7] sm:$0xff]
    %v789 = vld [vmem:[%s7 + $0x8] sm:$0xff]
    %v790 = vld [vmem:[%s7 + $0x10] sm:$0xff]
    %v791 = vld [vmem:[%s7 + $0x18] sm:$0xff]
    %v792 = vld [vmem:[%s8] sm:$0x1]
    %v794 = vlaneseq
    %v795 = vshrl.u32 %v794, 7
    %v796 = vsub.s32 0, %v795
    %v797 = vrot.slane %v792, %v796
    %v800 = vsel %vm221, %v787, 0
    %802 = vmatprep.subr.mxu0 0.0
    %803 = vmatpush1.msra.mxu0 0.0
    %804 = vmatprep.subr.mxu0 0.0
    %805 = vmatpush1.msra.mxu0 0.0
    %806 = vmatprep.subr.mxu0 0.0
    %807 = vmatpush1.msra.mxu0 0.0
    %808 = vmatprep.subr.mxu0 0.0
    %809 = vmatpush1.msra.mxu0 0.0
    %810 = vmatprep.subr.mxu0 0.0
    %811 = vmatpush1.msra.mxu0 0.0
    %812 = vmatprep.subr.mxu0 0.0
    %813 = vmatpush1.msra.mxu0 0.0
    %814 = vmatprep.subr.mxu0 0.0
    %815 = vmatpush1.msra.mxu0 0.0
    %816 = vmatprep.subr.mxu0 0.0
    %817 = vmatpush1.msra.mxu0 0.0
    %818 = vmatprep.subr.mxu0 0.0
    %819 = vmatpush1.msra.mxu0 0.0
    %820 = vmatprep.subr.mxu0 0.0
    %821 = vmatpush1.msra.mxu0 0.0
    %822 = vmatprep.subr.mxu0 0.0
    %823 = vmatpush1.msra.mxu0 0.0
    %824 = vmatprep.subr.mxu0 0.0
    %825 = vmatpush1.msra.mxu0 0.0
    %826 = vmatprep.subr.mxu0 0.0
    %827 = vmatpush1.msra.mxu0 %v791
    %828 = vmatprep.subr.mxu0 0.0
    %829 = vmatpush1.msra.mxu0 %v790
    %830 = vmatprep.subr.mxu0 0.0
    %831 = vmatpush1.msra.mxu0 %v789
    %832 = vmatprep.subr.mxu0 0.0
    %833 = vmatpush1.msra.mxu0 %v788
    %834 = vmatprep.subr.mxu0 0.0
    %835 = vmatpush2.msra.mxu0 0.0
    %836 = vmatprep.subr.mxu0 0.0
    %837 = vmatpush2.msra.mxu0 0.0
    %838 = vmatprep.subr.mxu0 0.0
    %839 = vmatpush2.msra.mxu0 0.0
    %840 = vmatprep.subr.mxu0 0.0
    %841 = vmatpush2.msra.mxu0 0.0
    %842 = vmatprep.subr.mxu0 0.0
    %843 = vmatpush2.msra.mxu0 0.0
    %844 = vmatprep.subr.mxu0 0.0
    %845 = vmatpush2.msra.mxu0 0.0
    %846 = vmatprep.subr.mxu0 0.0
    %847 = vmatpush2.msra.mxu0 0.0
    %848 = vmatprep.subr.mxu0 0.0
    %849 = vmatpush2.msra.mxu0 0.0
    %850 = vmatprep.subr.mxu0 0.0
    %851 = vmatpush2.msra.mxu0 0.0
    %852 = vmatprep.subr.mxu0 0.0
    %853 = vmatpush2.msra.mxu0 0.0
    %854 = vmatprep.subr.mxu0 0.0
    %855 = vmatpush2.msra.mxu0 0.0
    %856 = vmatprep.subr.mxu0 0.0
    %857 = vmatpush2.msra.mxu0 0.0
    %858 = vmatprep.subr.mxu0 0.0
    %859 = vmatpush2.msra.mxu0 0.0
    %860 = vmatprep.subr.mxu0 0.0
    %861 = vmatpush2.msra.mxu0 0.0
    %862 = vmatprep.subr.mxu0 0.0
    %863 = vmatpush2.msra.mxu0 0.0
    %864 = vmatprep.subr.mxu0 0.0
    %865 = vmatpush2.msra.mxu0 0.0
    %866 = vmatprep.mubr.f32.mxu0 0.0
    %867 = vmatmul.mubr.f32.gmra.mxu0 %v800
    %v868 = vpop.f32.mrf.mxu0
    %v869 = vadd.f32 %v797, %v868
    %v870 = vpop.f32.mrf.mxu0
    %871 = vdwg.mxu0
    %v872 = vsel %vm221, %v869, 0.0
    %v873 = vrot.slane %v872, 4
    %v874 = vadd.f32 %v872, %v873
    %v875 = vrot.slane %v874, 2
    %v876 = vadd.f32 %v874, %v875
    %v877 = vrot.slane %v876, 1
    %v878 = vadd.f32 %v876, %v877
    %v879 = vmul.f32 %v878, %v229
    %v880 = vsub.f32 %v869, %v879
    %v881 = vmul.f32 %v880, %v880
    %v882 = vsel %vm221, %v881, 0.0
    %v883 = vrot.slane %v882, 4
    %v884 = vadd.f32 %v882, %v883
    %v885 = vrot.slane %v884, 2
    %v886 = vadd.f32 %v884, %v885
    %v887 = vrot.slane %v886, 1
    %v888 = vadd.f32 %v886, %v887
    %v889 = vmul.f32 %v888, %v229
    %v890 = vadd.f32 %v889, 1e-05
    %v891 = vrsqrt.pop %v890
    %v892 = vmul.f32 %v880, %v891
    %v893 = vmax.f32 %v892, 0.0
    %v894 = vld [vmem:[%s9] sm:$0xff]
    %v895 = vld [vmem:[%s9 + $0x8] sm:$0xff]
    %v896 = vld [vmem:[%s9 + $0x10] sm:$0xff]
    %v897 = vld [vmem:[%s9 + $0x18] sm:$0xff]
    %v898 = vld [vmem:[%s10] sm:$0x1]
    %v900 = vlaneseq
    %v901 = vshrl.u32 %v900, 7
    %v902 = vsub.s32 0, %v901
    %v903 = vrot.slane %v898, %v902
    %v906 = vsel %vm221, %v893, 0
    %908 = vmatprep.subr.mxu0 0.0
    %909 = vmatpush1.msra.mxu0 0.0
    %910 = vmatprep.subr.mxu0 0.0
    %911 = vmatpush1.msra.mxu0 0.0
    %912 = vmatprep.subr.mxu0 0.0
    %913 = vmatpush1.msra.mxu0 0.0
    %914 = vmatprep.subr.mxu0 0.0
    %915 = vmatpush1.msra.mxu0 0.0
    %916 = vmatprep.subr.mxu0 0.0
    %917 = vmatpush1.msra.mxu0 0.0
    %918 = vmatprep.subr.mxu0 0.0
    %919 = vmatpush1.msra.mxu0 0.0
    %920 = vmatprep.subr.mxu0 0.0
    %921 = vmatpush1.msra.mxu0 0.0
    %922 = vmatprep.subr.mxu0 0.0
    %923 = vmatpush1.msra.mxu0 0.0
    %924 = vmatprep.subr.mxu0 0.0
    %925 = vmatpush1.msra.mxu0 0.0
    %926 = vmatprep.subr.mxu0 0.0
    %927 = vmatpush1.msra.mxu0 0.0
    %928 = vmatprep.subr.mxu0 0.0
    %929 = vmatpush1.msra.mxu0 0.0
    %930 = vmatprep.subr.mxu0 0.0
    %931 = vmatpush1.msra.mxu0 0.0
    %932 = vmatprep.subr.mxu0 0.0
    %933 = vmatpush1.msra.mxu0 %v897
    %934 = vmatprep.subr.mxu0 0.0
    %935 = vmatpush1.msra.mxu0 %v896
    %936 = vmatprep.subr.mxu0 0.0
    %937 = vmatpush1.msra.mxu0 %v895
    %938 = vmatprep.subr.mxu0 0.0
    %939 = vmatpush1.msra.mxu0 %v894
    %940 = vmatprep.subr.mxu0 0.0
    %941 = vmatpush2.msra.mxu0 0.0
    %942 = vmatprep.subr.mxu0 0.0
    %943 = vmatpush2.msra.mxu0 0.0
    %944 = vmatprep.subr.mxu0 0.0
    %945 = vmatpush2.msra.mxu0 0.0
    %946 = vmatprep.subr.mxu0 0.0
    %947 = vmatpush2.msra.mxu0 0.0
    %948 = vmatprep.subr.mxu0 0.0
    %949 = vmatpush2.msra.mxu0 0.0
    %950 = vmatprep.subr.mxu0 0.0
    %951 = vmatpush2.msra.mxu0 0.0
    %952 = vmatprep.subr.mxu0 0.0
    %953 = vmatpush2.msra.mxu0 0.0
    %954 = vmatprep.subr.mxu0 0.0
    %955 = vmatpush2.msra.mxu0 0.0
    %956 = vmatprep.subr.mxu0 0.0
    %957 = vmatpush2.msra.mxu0 0.0
    %958 = vmatprep.subr.mxu0 0.0
    %959 = vmatpush2.msra.mxu0 0.0
    %960 = vmatprep.subr.mxu0 0.0
    %961 = vmatpush2.msra.mxu0 0.0
    %962 = vmatprep.subr.mxu0 0.0
    %963 = vmatpush2.msra.mxu0 0.0
    %964 = vmatprep.subr.mxu0 0.0
    %965 = vmatpush2.msra.mxu0 0.0
    %966 = vmatprep.subr.mxu0 0.0
    %967 = vmatpush2.msra.mxu0 0.0
    %968 = vmatprep.subr.mxu0 0.0
    %969 = vmatpush2.msra.mxu0 0.0
    %970 = vmatprep.subr.mxu0 0.0
    %971 = vmatpush2.msra.mxu0 0.0
    %972 = vmatprep.mubr.f32.mxu0 0.0
    %973 = vmatmul.mubr.f32.gmra.mxu0 %v906
    %v974 = vpop.f32.mrf.mxu0
    %v975 = vadd.f32 %v903, %v974
    %v976 = vpop.f32.mrf.mxu0
    %977 = vdwg.mxu0
    %v978 = vsub.f32 %v567, %v664
    %v979 = vsub.f32 %v570, %v664
    %v980 = vsub.f32 %v573, %v664
    %v981 = vsub.f32 %v576, %v664
    %v982 = vsub.f32 %v579, %v664
    %v983 = vsub.f32 %v582, %v664
    %v984 = vsub.f32 %v585, %v664
    %v985 = vsub.f32 %v588, %v664
    %v986 = vmul.f32 %v978, %v683
    %v987 = vmul.f32 %v979, %v683
    %v988 = vmul.f32 %v980, %v683
    %v989 = vmul.f32 %v981, %v683
    %v990 = vmul.f32 %v982, %v683
    %v991 = vmul.f32 %v983, %v683
    %v992 = vmul.f32 %v984, %v683
    %v993 = vmul.f32 %v985, %v683
    %v994 = vmul.f32 %v975, 1.442695
    %v995 = vpow.pop %v994
    %v997 = vlaneseq
    %v998 = vshrl.u32 %v997, 7
    %v999 = vsub.s32 0, %v998
    %v1000 = vrot.slane %v995, %v999
    %s1002 = sor.u32 256, 252
    %1003 = vbcast.lane.b32.xlu0 %v1000, %s1002
    %v1004 = vpop.permute.xlu0 %1003
    %v1005 = vlaneseq
    %v1006 = vshrl.u32 %v1005, 7
    %v1007 = vsub.s32 1, %v1006
    %v1008 = vrot.slane %v995, %v1007
    %s1010 = sor.u32 256, 252
    %1011 = vbcast.lane.b32.xlu0 %v1008, %s1010
    %v1012 = vpop.permute.xlu0 %1011
    %v1013 = vlaneseq
    %v1014 = vshrl.u32 %v1013, 7
    %v1015 = vsub.s32 2, %v1014
    %v1016 = vrot.slane %v995, %v1015
    %s1018 = sor.u32 256, 252
    %1019 = vbcast.lane.b32.xlu0 %v1016, %s1018
    %v1020 = vpop.permute.xlu0 %1019
    %v1021 = vlaneseq
    %v1022 = vshrl.u32 %v1021, 7
    %v1023 = vsub.s32 3, %v1022
    %v1024 = vrot.slane %v995, %v1023
    %s1026 = sor.u32 256, 252
    %1027 = vbcast.lane.b32.xlu0 %v1024, %s1026
    %v1028 = vpop.permute.xlu0 %1027
    %v1029 = vlaneseq
    %v1030 = vshrl.u32 %v1029, 7
    %v1031 = vsub.s32 4, %v1030
    %v1032 = vrot.slane %v995, %v1031
    %s1034 = sor.u32 256, 252
    %1035 = vbcast.lane.b32.xlu0 %v1032, %s1034
    %v1036 = vpop.permute.xlu0 %1035
    %v1037 = vlaneseq
    %v1038 = vshrl.u32 %v1037, 7
    %v1039 = vsub.s32 5, %v1038
    %v1040 = vrot.slane %v995, %v1039
    %s1042 = sor.u32 256, 252
    %1043 = vbcast.lane.b32.xlu0 %v1040, %s1042
    %v1044 = vpop.permute.xlu0 %1043
    %v1045 = vlaneseq
    %v1046 = vshrl.u32 %v1045, 7
    %v1047 = vsub.s32 6, %v1046
    %v1048 = vrot.slane %v995, %v1047
    %s1050 = sor.u32 256, 252
    %1051 = vbcast.lane.b32.xlu0 %v1048, %s1050
    %v1052 = vpop.permute.xlu0 %1051
    %v1053 = vlaneseq
    %v1054 = vshrl.u32 %v1053, 7
    %v1055 = vsub.s32 7, %v1054
    %v1056 = vrot.slane %v995, %v1055
    %s1058 = sor.u32 256, 252
    %1059 = vbcast.lane.b32.xlu0 %v1056, %s1058
    %v1060 = vpop.permute.xlu0 %1059
    %v1069 = vmul.f32 %v986, %v1004
    %v1070 = vmul.f32 %v987, %v1012
    %v1071 = vmul.f32 %v988, %v1020
    %v1072 = vmul.f32 %v989, %v1028
    %v1073 = vmul.f32 %v990, %v1036
    %v1074 = vmul.f32 %v991, %v1044
    %v1075 = vmul.f32 %v992, %v1052
    %v1076 = vmul.f32 %v993, %v1060
    %v1078 = vlaneseq
    %v1079 = vshrl.u32 %v1078, 7
    %v1080 = vsub.s32 0, %v1079
    %v1081 = vrot.slane %v975, %v1080
    %1083 = vbcast.lane.b32.xlu0 %v1081, 256
    %v1084 = vpop.permute.xlu0 %1083
    %v1085 = vlaneseq
    %v1086 = vshrl.u32 %v1085, 7
    %v1087 = vsub.s32 1, %v1086
    %v1088 = vrot.slane %v975, %v1087
    %1090 = vbcast.lane.b32.xlu0 %v1088, 256
    %v1091 = vpop.permute.xlu0 %1090
    %v1092 = vlaneseq
    %v1093 = vshrl.u32 %v1092, 7
    %v1094 = vsub.s32 2, %v1093
    %v1095 = vrot.slane %v975, %v1094
    %1097 = vbcast.lane.b32.xlu0 %v1095, 256
    %v1098 = vpop.permute.xlu0 %1097
    %v1099 = vlaneseq
    %v1100 = vshrl.u32 %v1099, 7
    %v1101 = vsub.s32 3, %v1100
    %v1102 = vrot.slane %v975, %v1101
    %1104 = vbcast.lane.b32.xlu0 %v1102, 256
    %v1105 = vpop.permute.xlu0 %1104
    %v1106 = vlaneseq
    %v1107 = vshrl.u32 %v1106, 7
    %v1108 = vsub.s32 4, %v1107
    %v1109 = vrot.slane %v975, %v1108
    %1111 = vbcast.lane.b32.xlu0 %v1109, 256
    %v1112 = vpop.permute.xlu0 %1111
    %v1113 = vlaneseq
    %v1114 = vshrl.u32 %v1113, 7
    %v1115 = vsub.s32 5, %v1114
    %v1116 = vrot.slane %v975, %v1115
    %1118 = vbcast.lane.b32.xlu0 %v1116, 256
    %v1119 = vpop.permute.xlu0 %1118
    %v1120 = vlaneseq
    %v1121 = vshrl.u32 %v1120, 7
    %v1122 = vsub.s32 6, %v1121
    %v1123 = vrot.slane %v975, %v1122
    %1125 = vbcast.lane.b32.xlu0 %v1123, 256
    %v1126 = vpop.permute.xlu0 %1125
    %v1127 = vlaneseq
    %v1128 = vshrl.u32 %v1127, 7
    %v1129 = vsub.s32 7, %v1128
    %v1130 = vrot.slane %v975, %v1129
    %1132 = vbcast.lane.b32.xlu0 %v1130, 256
    %v1133 = vpop.permute.xlu0 %1132
    %v1142 = vadd.f32 %v1069, %v1084
    %v1143 = vadd.f32 %v1070, %v1091
    %v1144 = vadd.f32 %v1071, %v1098
    %v1145 = vadd.f32 %v1072, %v1105
    %v1146 = vadd.f32 %v1073, %v1112
    %v1147 = vadd.f32 %v1074, %v1119
    %v1148 = vadd.f32 %v1075, %v1126
    %v1149 = vadd.f32 %v1076, %v1133
    %v1150 = vand.u32 2147483647, %v975
    %v1151 = vadd.f32 %v1150, 1e-09
    %v1152 = vlog2.pop %v1151
    %v1153 = vmul.f32 %v1152, 0.6931472
    %v1154 = vsel %vm100, %v1153, 0.0
    %1155 = vadd.xlane.f32.xlu0 %v1154
    %v1156 = vpop.xlane.xlu0 %1155
    %v1157 = vmul.f32 %v1156, %v452
    %v1158 = vadd.f32 %v454, %v1157
    %1159 = vst.msk [vmem:[#allocation3] sm:$0xff] %vm100, %v644
    %1168 = vset.pattern.permute.xlu0 0
    %1169 = vperm.xlu0 %1168, %v1142
    %v1170 = vpop.permute.xlu0 %1169
    %1171 = vset.pattern.permute.xlu0 0
    %1172 = vperm.xlu0 %1171, %v1143
    %v1173 = vpop.permute.xlu0 %1172
    %1174 = vset.pattern.permute.xlu0 0
    %1175 = vperm.xlu0 %1174, %v1144
    %v1176 = vpop.permute.xlu0 %1175
    %1177 = vset.pattern.permute.xlu0 0
    %1178 = vperm.xlu0 %1177, %v1145
    %v1179 = vpop.permute.xlu0 %1178
    %1180 = vset.pattern.permute.xlu0 0
    %1181 = vperm.xlu0 %1180, %v1146
    %v1182 = vpop.permute.xlu0 %1181
    %1183 = vset.pattern.permute.xlu0 0
    %1184 = vperm.xlu0 %1183, %v1147
    %v1185 = vpop.permute.xlu0 %1184
    %1186 = vset.pattern.permute.xlu0 0
    %1187 = vperm.xlu0 %1186, %v1148
    %v1188 = vpop.permute.xlu0 %1187
    %1189 = vset.pattern.permute.xlu0 0
    %1190 = vperm.xlu0 %1189, %v1149
    %v1191 = vpop.permute.xlu0 %1190
    %v1192 = vlaneseq
    %v1193 = vshrl.u32 %v1192, 7
    %v1194 = vsub.s32 %v598, %v1193
    %v1195 = vrot.slane %v1170, %v1194
    %v1196 = vlaneseq
    %v1197 = vshrl.u32 %v1196, 7
    %v1198 = vsub.s32 %v598, %v1197
    %v1199 = vrot.slane %v1173, %v1198
    %v1200 = vlaneseq
    %v1201 = vshrl.u32 %v1200, 7
    %v1202 = vsub.s32 %v598, %v1201
    %v1203 = vrot.slane %v1176, %v1202
    %v1204 = vlaneseq
    %v1205 = vshrl.u32 %v1204, 7
    %v1206 = vsub.s32 %v598, %v1205
    %v1207 = vrot.slane %v1179, %v1206
    %v1208 = vlaneseq
    %v1209 = vshrl.u32 %v1208, 7
    %v1210 = vsub.s32 %v598, %v1209
    %v1211 = vrot.slane %v1182, %v1210
    %v1212 = vlaneseq
    %v1213 = vshrl.u32 %v1212, 7
    %v1214 = vsub.s32 %v598, %v1213
    %v1215 = vrot.slane %v1185, %v1214
    %v1216 = vlaneseq
    %v1217 = vshrl.u32 %v1216, 7
    %v1218 = vsub.s32 %v598, %v1217
    %v1219 = vrot.slane %v1188, %v1218
    %v1220 = vlaneseq
    %v1221 = vshrl.u32 %v1220, 7
    %v1222 = vsub.s32 %v598, %v1221
    %v1223 = vrot.slane %v1191, %v1222
    %v1224 = vsel %vm639, %v1199, %v1195
    %v1225 = vsel %vm641, %v1203, %v1224
    %v1226 = vsel %vm643, %v1207, %v1225
    %v1227 = vsel %vm631, %v1215, %v1211
    %v1228 = vsel %vm633, %v1219, %v1227
    %v1229 = vsel %vm635, %v1223, %v1228
    %vm1232 = vcmask 64548
    %1233 = vst.msk [vmem:[#allocation3 - $0x4] sm:$0xf0] %vm1232, %v1226
    %vm1234 = vcmask 60448
    %1235 = vst.msk [vmem:[#allocation3 + $0x4] sm:$0xf] %vm1234, %v1229
    %v1236 = vld [vmem:[#allocation3] sm:$0xff]
    %s1237 = scalar_lea.vmem [#allocation7], 64
    %v1238 = vld [vmem:[%s1237] sm:$0xff]
    %v1239 = vld [vmem:[%s1237 + $0x8] sm:$0xff]
    %v1240 = vld [vmem:[%s1237 + $0x10] sm:$0xff]
    %v1241 = vld [vmem:[%s1237 + $0x18] sm:$0xff]
    %v1242 = vld [vmem:[%s1237 + $0x20] sm:$0xff]
    %v1243 = vld [vmem:[%s1237 + $0x28] sm:$0xff]
    %v1244 = vld [vmem:[%s1237 + $0x30] sm:$0xff]
    %v1245 = vld [vmem:[%s1237 + $0x38] sm:$0xff]
    %v1247 = vcombine.high %v1236, %v1236
    %v1249 = vunpack.c.l.s4 1966171168
    %v1250 = vunpack.c.0.s8 %v1249
    %v1251 = vlaneseq
    %v1252 = vshrl.u32 %v1251, 7
    %v1253 = vsub.s32 %v1250, %v1252
    %v1254 = vrot.slane %v1236, %v1253
    %v1256 = vunpack.c.l.s4 1966171168
    %v1257 = vunpack.c.0.s8 %v1256
    %v1258 = vlaneseq
    %v1259 = vshrl.u32 %v1258, 7
    %v1260 = vsub.s32 %v1257, %v1259
    %v1261 = vrot.slane %v1247, %v1260
    %v1262 = vcombine.high %v1254, %v1254
    %v1263 = vcombine.high %v1261, %v1261
    %v1265 = vunpack.c.l.s4 1966171168
    %v1266 = vunpack.c.0.s8 %v1265
    %v1267 = vlaneseq
    %v1268 = vshrl.u32 %v1267, 7
    %v1269 = vsub.s32 %v1266, %v1268
    %v1270 = vrot.slane %v1254, %v1269
    %v1272 = vunpack.c.l.s4 1966171168
    %v1273 = vunpack.c.0.s8 %v1272
    %v1274 = vlaneseq
    %v1275 = vshrl.u32 %v1274, 7
    %v1276 = vsub.s32 %v1273, %v1275
    %v1277 = vrot.slane %v1261, %v1276
    %v1279 = vunpack.c.l.s4 1966171168
    %v1280 = vunpack.c.0.s8 %v1279
    %v1281 = vlaneseq
    %v1282 = vshrl.u32 %v1281, 7
    %v1283 = vsub.s32 %v1280, %v1282
    %v1284 = vrot.slane %v1262, %v1283
    %v1286 = vunpack.c.l.s4 1966171168
    %v1287 = vunpack.c.0.s8 %v1286
    %v1288 = vlaneseq
    %v1289 = vshrl.u32 %v1288, 7
    %v1290 = vsub.s32 %v1287, %v1289
    %v1291 = vrot.slane %v1263, %v1290
    %v1292 = vcombine.high %v1270, %v1270
    %v1293 = vcombine.high %v1277, %v1277
    %v1294 = vcombine.high %v1284, %v1284
    %v1295 = vcombine.high %v1291, %v1291
    %v1296 = vlaneseq
    %v1297 = vshrl.u32 %v1296, 7
    %v1298 = vsub.s32 0, %v1297
    %v1299 = vrot.slane %v1270, %v1298
    %v1300 = vlaneseq
    %v1301 = vshrl.u32 %v1300, 7
    %v1302 = vsub.s32 0, %v1301
    %v1303 = vrot.slane %v1284, %v1302
    %v1304 = vlaneseq
    %v1305 = vshrl.u32 %v1304, 7
    %v1306 = vsub.s32 0, %v1305
    %v1307 = vrot.slane %v1292, %v1306
    %v1308 = vlaneseq
    %v1309 = vshrl.u32 %v1308, 7
    %v1310 = vsub.s32 0, %v1309
    %v1311 = vrot.slane %v1294, %v1310
    %v1312 = vlaneseq
    %v1313 = vshrl.u32 %v1312, 7
    %v1314 = vsub.s32 0, %v1313
    %v1315 = vrot.slane %v1277, %v1314
    %v1316 = vlaneseq
    %v1317 = vshrl.u32 %v1316, 7
    %v1318 = vsub.s32 0, %v1317
    %v1319 = vrot.slane %v1291, %v1318
    %v1320 = vlaneseq
    %v1321 = vshrl.u32 %v1320, 7
    %v1322 = vsub.s32 0, %v1321
    %v1323 = vrot.slane %v1293, %v1322
    %v1324 = vlaneseq
    %v1325 = vshrl.u32 %v1324, 7
    %v1326 = vsub.s32 0, %v1325
    %v1327 = vrot.slane %v1295, %v1326
    %v1336 = vmul.f32 %v1238, %v1299
    %v1337 = vmul.f32 %v1239, %v1303
    %v1338 = vmul.f32 %v1240, %v1307
    %v1339 = vmul.f32 %v1241, %v1311
    %v1340 = vmul.f32 %v1242, %v1315
    %v1341 = vmul.f32 %v1243, %v1319
    %v1342 = vmul.f32 %v1244, %v1323
    %v1343 = vmul.f32 %v1245, %v1327
    %v1344 = vsel %vm105, %v1336, 0.0
    %1345 = vadd.xlane.f32.xlu0 %v1344
    %v1346 = vpop.xlane.xlu0 %1345
    %v1347 = vsel %vm105, %v1337, 0.0
    %1348 = vadd.xlane.f32.xlu0 %v1347
    %v1349 = vpop.xlane.xlu0 %1348
    %v1350 = vsel %vm105, %v1338, 0.0
    %1351 = vadd.xlane.f32.xlu0 %v1350
    %v1352 = vpop.xlane.xlu0 %1351
    %v1353 = vsel %vm105, %v1339, 0.0
    %1354 = vadd.xlane.f32.xlu0 %v1353
    %v1355 = vpop.xlane.xlu0 %1354
    %v1356 = vsel %vm105, %v1340, 0.0
    %1357 = vadd.xlane.f32.xlu0 %v1356
    %v1358 = vpop.xlane.xlu0 %1357
    %v1359 = vsel %vm105, %v1341, 0.0
    %1360 = vadd.xlane.f32.xlu0 %v1359
    %v1361 = vpop.xlane.xlu0 %1360
    %v1362 = vsel %vm105, %v1342, 0.0
    %1363 = vadd.xlane.f32.xlu0 %v1362
    %v1364 = vpop.xlane.xlu0 %1363
    %v1365 = vsel %vm105, %v1343, 0.0
    %1366 = vadd.xlane.f32.xlu0 %v1365
    %v1367 = vpop.xlane.xlu0 %1366
    %v1376 = vlaneseq
    %v1377 = vshrl.u32 %v1376, 7
    %v1378 = vsub.s32 %v598, %v1377
    %v1379 = vrot.slane %v1346, %v1378
    %v1380 = vlaneseq
    %v1381 = vshrl.u32 %v1380, 7
    %v1382 = vsub.s32 %v598, %v1381
    %v1383 = vrot.slane %v1349, %v1382
    %v1384 = vlaneseq
    %v1385 = vshrl.u32 %v1384, 7
    %v1386 = vsub.s32 %v598, %v1385
    %v1387 = vrot.slane %v1352, %v1386
    %v1388 = vlaneseq
    %v1389 = vshrl.u32 %v1388, 7
    %v1390 = vsub.s32 %v598, %v1389
    %v1391 = vrot.slane %v1355, %v1390
    %v1392 = vlaneseq
    %v1393 = vshrl.u32 %v1392, 7
    %v1394 = vsub.s32 %v598, %v1393
    %v1395 = vrot.slane %v1358, %v1394
    %v1396 = vlaneseq
    %v1397 = vshrl.u32 %v1396, 7
    %v1398 = vsub.s32 %v598, %v1397
    %v1399 = vrot.slane %v1361, %v1398
    %v1400 = vlaneseq
    %v1401 = vshrl.u32 %v1400, 7
    %v1402 = vsub.s32 %v598, %v1401
    %v1403 = vrot.slane %v1364, %v1402
    %v1404 = vlaneseq
    %v1405 = vshrl.u32 %v1404, 7
    %v1406 = vsub.s32 %v598, %v1405
    %v1407 = vrot.slane %v1367, %v1406
    %v1408 = vsel %vm631, %v1383, %v1379
    %v1409 = vsel %vm633, %v1387, %v1408
    %v1410 = vsel %vm635, %v1391, %v1409
    %v1411 = vsel %vm637, %v1395, %v1410
    %v1412 = vsel %vm639, %v1399, %v1411
    %v1413 = vsel %vm641, %v1403, %v1412
    %v1414 = vsel %vm643, %v1407, %v1413
    %1416 = vst.msk [vmem:[#allocation2] sm:$0xff] %vm100, %v1414
    %v1417 = vld [vmem:[#allocation2] sm:$0xff]
    %s1418 = scalar_lea.vmem %s3, 16
    %v1419 = vld [vmem:[%s1418] sm:$0xff]
    %v1420 = vadd.f32 %v1417, %v1419
    %v1421 = vsel %vm105, %v1420, 0.0
    %1422 = vadd.xlane.f32.xlu0 %v1421
    %v1423 = vpop.xlane.xlu0 %1422
    %v1424 = vrot.slane %v1423, 4
    %v1425 = vadd.f32 %v1423, %v1424
    %v1426 = vrot.slane %v1425, 2
    %v1427 = vadd.f32 %v1425, %v1426
    %v1428 = vrot.slane %v1427, 1
    %v1429 = vadd.f32 %v1427, %v1428
    %s1430 = vtos %v1429
    %v1431 = vrcp.pop 64.0
    %s1432 = vtos %v1431
    %s1433 = smul.f32 %s1430, %s1432
    %v1434 = vstv %s1433
    %v1435 = vsub.f32 %v1420, %v1434
    %v1436 = vmul.f32 %v1435, %v1435
    %v1437 = vsel %vm105, %v1436, 0.0
    %1438 = vadd.xlane.f32.xlu0 %v1437
    %v1439 = vpop.xlane.xlu0 %1438
    %v1440 = vrot.slane %v1439, 4
    %v1441 = vadd.f32 %v1439, %v1440
    %v1442 = vrot.slane %v1441, 2
    %v1443 = vadd.f32 %v1441, %v1442
    %v1444 = vrot.slane %v1443, 1
    %v1445 = vadd.f32 %v1443, %v1444
    %s1446 = vtos %v1445
    %v1447 = vrcp.pop 63.0
    %s1448 = vtos %v1447
    %s1449 = smul.f32 %s1446, %s1448
    %v1450 = vstv %s1449
    %v1451 = vrsqrt.pop %v1450
    %s1452 = vtos %v1451
    %v1453 = vstv %s1452
    %v1454 = vmul.f32 %v1435, %v1453
    %v1455 = vld [vmem:[#allocation9] sm:$0xff]
    %v1456 = vld [vmem:[#allocation10] sm:$0x1]
    %v1458 = vlaneseq
    %v1459 = vshrl.u32 %v1458, 7
    %v1460 = vsub.s32 0, %v1459
    %v1461 = vrot.slane %v1456, %v1460
    %v1464 = vsel %vm105, %v1454, 0
    %1466 = vmatprep.subr.mxu0 0.0
    %1467 = vmatpush1.msra.mxu0 0.0
    %1468 = vmatprep.subr.mxu0 0.0
    %1469 = vmatpush1.msra.mxu0 0.0
    %1470 = vmatprep.subr.mxu0 0.0
    %1471 = vmatpush1.msra.mxu0 0.0
    %1472 = vmatprep.subr.mxu0 0.0
    %1473 = vmatpush1.msra.mxu0 0.0
    %1474 = vmatprep.subr.mxu0 0.0
    %1475 = vmatpush1.msra.mxu0 0.0
    %1476 = vmatprep.subr.mxu0 0.0
    %1477 = vmatpush1.msra.mxu0 0.0
    %1478 = vmatprep.subr.mxu0 0.0
    %1479 = vmatpush1.msra.mxu0 0.0
    %1480 = vmatprep.subr.mxu0 0.0
    %1481 = vmatpush1.msra.mxu0 0.0
    %1482 = vmatprep.subr.mxu0 0.0
    %1483 = vmatpush1.msra.mxu0 0.0
    %1484 = vmatprep.subr.mxu0 0.0
    %1485 = vmatpush1.msra.mxu0 0.0
    %1486 = vmatprep.subr.mxu0 0.0
    %1487 = vmatpush1.msra.mxu0 0.0
    %1488 = vmatprep.subr.mxu0 0.0
    %1489 = vmatpush1.msra.mxu0 0.0
    %1490 = vmatprep.subr.mxu0 0.0
    %1491 = vmatpush1.msra.mxu0 0.0
    %1492 = vmatprep.subr.mxu0 0.0
    %1493 = vmatpush1.msra.mxu0 0.0
    %1494 = vmatprep.subr.mxu0 0.0
    %1495 = vmatpush1.msra.mxu0 0.0
    %1496 = vmatprep.subr.mxu0 0.0
    %1497 = vmatpush1.msra.mxu0 %v1455
    %1498 = vmatprep.subr.mxu0 0.0
    %1499 = vmatpush2.msra.mxu0 0.0
    %1500 = vmatprep.subr.mxu0 0.0
    %1501 = vmatpush2.msra.mxu0 0.0
    %1502 = vmatprep.subr.mxu0 0.0
    %1503 = vmatpush2.msra.mxu0 0.0
    %1504 = vmatprep.subr.mxu0 0.0
    %1505 = vmatpush2.msra.mxu0 0.0
    %1506 = vmatprep.subr.mxu0 0.0
    %1507 = vmatpush2.msra.mxu0 0.0
    %1508 = vmatprep.subr.mxu0 0.0
    %1509 = vmatpush2.msra.mxu0 0.0
    %1510 = vmatprep.subr.mxu0 0.0
    %1511 = vmatpush2.msra.mxu0 0.0
    %1512 = vmatprep.subr.mxu0 0.0
    %1513 = vmatpush2.msra.mxu0 0.0
    %1514 = vmatprep.subr.mxu0 0.0
    %1515 = vmatpush2.msra.mxu0 0.0
    %1516 = vmatprep.subr.mxu0 0.0
    %1517 = vmatpush2.msra.mxu0 0.0
    %1518 = vmatprep.subr.mxu0 0.0
    %1519 = vmatpush2.msra.mxu0 0.0
    %1520 = vmatprep.subr.mxu0 0.0
    %1521 = vmatpush2.msra.mxu0 0.0
    %1522 = vmatprep.subr.mxu0 0.0
    %1523 = vmatpush2.msra.mxu0 0.0
    %1524 = vmatprep.subr.mxu0 0.0
    %1525 = vmatpush2.msra.mxu0 0.0
    %1526 = vmatprep.subr.mxu0 0.0
    %1527 = vmatpush2.msra.mxu0 0.0
    %1528 = vmatprep.subr.mxu0 0.0
    %1529 = vmatpush2.msra.mxu0 0.0
    %1530 = vmatprep.mubr.f32.mxu0 0.0
    %1531 = vmatmul.mubr.f32.gmra.mxu0 %v1464
    %v1532 = vpop.f32.mrf.mxu0
    %v1533 = vadd.f32 %v1461, %v1532
    %v1534 = vpop.f32.mrf.mxu0
    %1535 = vdwg.mxu0
    %v1536 = vsel %vm221, %v1533, 0.0
    %v1537 = vrot.slane %v1536, 4
    %v1538 = vadd.f32 %v1536, %v1537
    %v1539 = vrot.slane %v1538, 2
    %v1540 = vadd.f32 %v1538, %v1539
    %v1541 = vrot.slane %v1540, 1
    %v1542 = vadd.f32 %v1540, %v1541
    %v1543 = vmul.f32 %v1542, %v229
    %v1544 = vsub.f32 %v1533, %v1543
    %v1545 = vmul.f32 %v1544, %v1544
    %v1546 = vsel %vm221, %v1545, 0.0
    %v1547 = vrot.slane %v1546, 4
    %v1548 = vadd.f32 %v1546, %v1547
    %v1549 = vrot.slane %v1548, 2
    %v1550 = vadd.f32 %v1548, %v1549
    %v1551 = vrot.slane %v1550, 1
    %v1552 = vadd.f32 %v1550, %v1551
    %v1553 = vmul.f32 %v1552, %v229
    %v1554 = vadd.f32 %v1553, 1e-05
    %v1555 = vrsqrt.pop %v1554
    %v1556 = vmul.f32 %v1544, %v1555
    %v1557 = vmax.f32 %v1556, 0.0
    %v1558 = vld [vmem:[%s7] sm:$0xff]
    %v1559 = vld [vmem:[%s7 + $0x8] sm:$0xff]
    %v1560 = vld [vmem:[%s7 + $0x10] sm:$0xff]
    %v1561 = vld [vmem:[%s7 + $0x18] sm:$0xff]
    %v1562 = vld [vmem:[%s8] sm:$0x1]
    %v1564 = vlaneseq
    %v1565 = vshrl.u32 %v1564, 7
    %v1566 = vsub.s32 0, %v1565
    %v1567 = vrot.slane %v1562, %v1566
    %v1570 = vsel %vm221, %v1557, 0
    %1572 = vmatprep.subr.mxu0 0.0
    %1573 = vmatpush1.msra.mxu0 0.0
    %1574 = vmatprep.subr.mxu0 0.0
    %1575 = vmatpush1.msra.mxu0 0.0
    %1576 = vmatprep.subr.mxu0 0.0
    %1577 = vmatpush1.msra.mxu0 0.0
    %1578 = vmatprep.subr.mxu0 0.0
    %1579 = vmatpush1.msra.mxu0 0.0
    %1580 = vmatprep.subr.mxu0 0.0
    %1581 = vmatpush1.msra.mxu0 0.0
    %1582 = vmatprep.subr.mxu0 0.0
    %1583 = vmatpush1.msra.mxu0 0.0
    %1584 = vmatprep.subr.mxu0 0.0
    %1585 = vmatpush1.msra.mxu0 0.0
    %1586 = vmatprep.subr.mxu0 0.0
    %1587 = vmatpush1.msra.mxu0 0.0
    %1588 = vmatprep.subr.mxu0 0.0
    %1589 = vmatpush1.msra.mxu0 0.0
    %1590 = vmatprep.subr.mxu0 0.0
    %1591 = vmatpush1.msra.mxu0 0.0
    %1592 = vmatprep.subr.mxu0 0.0
    %1593 = vmatpush1.msra.mxu0 0.0
    %1594 = vmatprep.subr.mxu0 0.0
    %1595 = vmatpush1.msra.mxu0 0.0
    %1596 = vmatprep.subr.mxu0 0.0
    %1597 = vmatpush1.msra.mxu0 %v1561
    %1598 = vmatprep.subr.mxu0 0.0
    %1599 = vmatpush1.msra.mxu0 %v1560
    %1600 = vmatprep.subr.mxu0 0.0
    %1601 = vmatpush1.msra.mxu0 %v1559
    %1602 = vmatprep.subr.mxu0 0.0
    %1603 = vmatpush1.msra.mxu0 %v1558
    %1604 = vmatprep.subr.mxu0 0.0
    %1605 = vmatpush2.msra.mxu0 0.0
    %1606 = vmatprep.subr.mxu0 0.0
    %1607 = vmatpush2.msra.mxu0 0.0
    %1608 = vmatprep.subr.mxu0 0.0
    %1609 = vmatpush2.msra.mxu0 0.0
    %1610 = vmatprep.subr.mxu0 0.0
    %1611 = vmatpush2.msra.mxu0 0.0
    %1612 = vmatprep.subr.mxu0 0.0
    %1613 = vmatpush2.msra.mxu0 0.0
    %1614 = vmatprep.subr.mxu0 0.0
    %1615 = vmatpush2.msra.mxu0 0.0
    %1616 = vmatprep.subr.mxu0 0.0
    %1617 = vmatpush2.msra.mxu0 0.0
    %1618 = vmatprep.subr.mxu0 0.0
    %1619 = vmatpush2.msra.mxu0 0.0
    %1620 = vmatprep.subr.mxu0 0.0
    %1621 = vmatpush2.msra.mxu0 0.0
    %1622 = vmatprep.subr.mxu0 0.0
    %1623 = vmatpush2.msra.mxu0 0.0
    %1624 = vmatprep.subr.mxu0 0.0
    %1625 = vmatpush2.msra.mxu0 0.0
    %1626 = vmatprep.subr.mxu0 0.0
    %1627 = vmatpush2.msra.mxu0 0.0
    %1628 = vmatprep.subr.mxu0 0.0
    %1629 = vmatpush2.msra.mxu0 0.0
    %1630 = vmatprep.subr.mxu0 0.0
    %1631 = vmatpush2.msra.mxu0 0.0
    %1632 = vmatprep.subr.mxu0 0.0
    %1633 = vmatpush2.msra.mxu0 0.0
    %1634 = vmatprep.subr.mxu0 0.0
    %1635 = vmatpush2.msra.mxu0 0.0
    %1636 = vmatprep.mubr.f32.mxu0 0.0
    %1637 = vmatmul.mubr.f32.gmra.mxu0 %v1570
    %v1638 = vpop.f32.mrf.mxu0
    %v1639 = vadd.f32 %v1567, %v1638
    %v1640 = vpop.f32.mrf.mxu0
    %1641 = vdwg.mxu0
    %v1642 = vsel %vm221, %v1639, 0.0
    %v1643 = vrot.slane %v1642, 4
    %v1644 = vadd.f32 %v1642, %v1643
    %v1645 = vrot.slane %v1644, 2
    %v1646 = vadd.f32 %v1644, %v1645
    %v1647 = vrot.slane %v1646, 1
    %v1648 = vadd.f32 %v1646, %v1647
    %v1649 = vmul.f32 %v1648, %v229
    %v1650 = vsub.f32 %v1639, %v1649
    %v1651 = vmul.f32 %v1650, %v1650
    %v1652 = vsel %vm221, %v1651, 0.0
    %v1653 = vrot.slane %v1652, 4
    %v1654 = vadd.f32 %v1652, %v1653
    %v1655 = vrot.slane %v1654, 2
    %v1656 = vadd.f32 %v1654, %v1655
    %v1657 = vrot.slane %v1656, 1
    %v1658 = vadd.f32 %v1656, %v1657
    %v1659 = vmul.f32 %v1658, %v229
    %v1660 = vadd.f32 %v1659, 1e-05
    %v1661 = vrsqrt.pop %v1660
    %v1662 = vmul.f32 %v1650, %v1661
    %v1663 = vmax.f32 %v1662, 0.0
    %v1664 = vld [vmem:[%s9] sm:$0xff]
    %v1665 = vld [vmem:[%s9 + $0x8] sm:$0xff]
    %v1666 = vld [vmem:[%s9 + $0x10] sm:$0xff]
    %v1667 = vld [vmem:[%s9 + $0x18] sm:$0xff]
    %v1668 = vld [vmem:[%s10] sm:$0x1]
    %v1670 = vlaneseq
    %v1671 = vshrl.u32 %v1670, 7
    %v1672 = vsub.s32 0, %v1671
    %v1673 = vrot.slane %v1668, %v1672
    %v1676 = vsel %vm221, %v1663, 0
    %1678 = vmatprep.subr.mxu0 0.0
    %1679 = vmatpush1.msra.mxu0 0.0
    %1680 = vmatprep.subr.mxu0 0.0
    %1681 = vmatpush1.msra.mxu0 0.0
    %1682 = vmatprep.subr.mxu0 0.0
    %1683 = vmatpush1.msra.mxu0 0.0
    %1684 = vmatprep.subr.mxu0 0.0
    %1685 = vmatpush1.msra.mxu0 0.0
    %1686 = vmatprep.subr.mxu0 0.0
    %1687 = vmatpush1.msra.mxu0 0.0
    %1688 = vmatprep.subr.mxu0 0.0
    %1689 = vmatpush1.msra.mxu0 0.0
    %1690 = vmatprep.subr.mxu0 0.0
    %1691 = vmatpush1.msra.mxu0 0.0
    %1692 = vmatprep.subr.mxu0 0.0
    %1693 = vmatpush1.msra.mxu0 0.0
    %1694 = vmatprep.subr.mxu0 0.0
    %1695 = vmatpush1.msra.mxu0 0.0
    %1696 = vmatprep.subr.mxu0 0.0
    %1697 = vmatpush1.msra.mxu0 0.0
    %1698 = vmatprep.subr.mxu0 0.0
    %1699 = vmatpush1.msra.mxu0 0.0
    %1700 = vmatprep.subr.mxu0 0.0
    %1701 = vmatpush1.msra.mxu0 0.0
    %1702 = vmatprep.subr.mxu0 0.0
    %1703 = vmatpush1.msra.mxu0 %v1667
    %1704 = vmatprep.subr.mxu0 0.0
    %1705 = vmatpush1.msra.mxu0 %v1666
    %1706 = vmatprep.subr.mxu0 0.0
    %1707 = vmatpush1.msra.mxu0 %v1665
    %1708 = vmatprep.subr.mxu0 0.0
    %1709 = vmatpush1.msra.mxu0 %v1664
    %1710 = vmatprep.subr.mxu0 0.0
    %1711 = vmatpush2.msra.mxu0 0.0
    %1712 = vmatprep.subr.mxu0 0.0
    %1713 = vmatpush2.msra.mxu0 0.0
    %1714 = vmatprep.subr.mxu0 0.0
    %1715 = vmatpush2.msra.mxu0 0.0
    %1716 = vmatprep.subr.mxu0 0.0
    %1717 = vmatpush2.msra.mxu0 0.0
    %1718 = vmatprep.subr.mxu0 0.0
    %1719 = vmatpush2.msra.mxu0 0.0
    %1720 = vmatprep.subr.mxu0 0.0
    %1721 = vmatpush2.msra.mxu0 0.0
    %1722 = vmatprep.subr.mxu0 0.0
    %1723 = vmatpush2.msra.mxu0 0.0
    %1724 = vmatprep.subr.mxu0 0.0
    %1725 = vmatpush2.msra.mxu0 0.0
    %1726 = vmatprep.subr.mxu0 0.0
    %1727 = vmatpush2.msra.mxu0 0.0
    %1728 = vmatprep.subr.mxu0 0.0
    %1729 = vmatpush2.msra.mxu0 0.0
    %1730 = vmatprep.subr.mxu0 0.0
    %1731 = vmatpush2.msra.mxu0 0.0
    %1732 = vmatprep.subr.mxu0 0.0
    %1733 = vmatpush2.msra.mxu0 0.0
    %1734 = vmatprep.subr.mxu0 0.0
    %1735 = vmatpush2.msra.mxu0 0.0
    %1736 = vmatprep.subr.mxu0 0.0
    %1737 = vmatpush2.msra.mxu0 0.0
    %1738 = vmatprep.subr.mxu0 0.0
    %1739 = vmatpush2.msra.mxu0 0.0
    %1740 = vmatprep.subr.mxu0 0.0
    %1741 = vmatpush2.msra.mxu0 0.0
    %1742 = vmatprep.mubr.f32.mxu0 0.0
    %1743 = vmatmul.mubr.f32.gmra.mxu0 %v1676
    %v1744 = vpop.f32.mrf.mxu0
    %v1745 = vadd.f32 %v1673, %v1744
    %v1746 = vpop.f32.mrf.mxu0
    %1747 = vdwg.mxu0
    %v1748 = vsub.f32 %v1346, %v1434
    %v1749 = vsub.f32 %v1349, %v1434
    %v1750 = vsub.f32 %v1352, %v1434
    %v1751 = vsub.f32 %v1355, %v1434
    %v1752 = vsub.f32 %v1358, %v1434
    %v1753 = vsub.f32 %v1361, %v1434
    %v1754 = vsub.f32 %v1364, %v1434
    %v1755 = vsub.f32 %v1367, %v1434
    %v1756 = vmul.f32 %v1748, %v1453
    %v1757 = vmul.f32 %v1749, %v1453
    %v1758 = vmul.f32 %v1750, %v1453
    %v1759 = vmul.f32 %v1751, %v1453
    %v1760 = vmul.f32 %v1752, %v1453
    %v1761 = vmul.f32 %v1753, %v1453
    %v1762 = vmul.f32 %v1754, %v1453
    %v1763 = vmul.f32 %v1755, %v1453
    %v1764 = vmul.f32 %v1745, 1.442695
    %v1765 = vpow.pop %v1764
    %v1767 = vlaneseq
    %v1768 = vshrl.u32 %v1767, 7
    %v1769 = vsub.s32 0, %v1768
    %v1770 = vrot.slane %v1765, %v1769
    %s1772 = sor.u32 256, 252
    %1773 = vbcast.lane.b32.xlu0 %v1770, %s1772
    %v1774 = vpop.permute.xlu0 %1773
    %v1775 = vlaneseq
    %v1776 = vshrl.u32 %v1775, 7
    %v1777 = vsub.s32 1, %v1776
    %v1778 = vrot.slane %v1765, %v1777
    %s1780 = sor.u32 256, 252
    %1781 = vbcast.lane.b32.xlu0 %v1778, %s1780
    %v1782 = vpop.permute.xlu0 %1781
    %v1783 = vlaneseq
    %v1784 = vshrl.u32 %v1783, 7
    %v1785 = vsub.s32 2, %v1784
    %v1786 = vrot.slane %v1765, %v1785
    %s1788 = sor.u32 256, 252
    %1789 = vbcast.lane.b32.xlu0 %v1786, %s1788
    %v1790 = vpop.permute.xlu0 %1789
    %v1791 = vlaneseq
    %v1792 = vshrl.u32 %v1791, 7
    %v1793 = vsub.s32 3, %v1792
    %v1794 = vrot.slane %v1765, %v1793
    %s1796 = sor.u32 256, 252
    %1797 = vbcast.lane.b32.xlu0 %v1794, %s1796
    %v1798 = vpop.permute.xlu0 %1797
    %v1799 = vlaneseq
    %v1800 = vshrl.u32 %v1799, 7
    %v1801 = vsub.s32 4, %v1800
    %v1802 = vrot.slane %v1765, %v1801
    %s1804 = sor.u32 256, 252
    %1805 = vbcast.lane.b32.xlu0 %v1802, %s1804
    %v1806 = vpop.permute.xlu0 %1805
    %v1807 = vlaneseq
    %v1808 = vshrl.u32 %v1807, 7
    %v1809 = vsub.s32 5, %v1808
    %v1810 = vrot.slane %v1765, %v1809
    %s1812 = sor.u32 256, 252
    %1813 = vbcast.lane.b32.xlu0 %v1810, %s1812
    %v1814 = vpop.permute.xlu0 %1813
    %v1815 = vlaneseq
    %v1816 = vshrl.u32 %v1815, 7
    %v1817 = vsub.s32 6, %v1816
    %v1818 = vrot.slane %v1765, %v1817
    %s1820 = sor.u32 256, 252
    %1821 = vbcast.lane.b32.xlu0 %v1818, %s1820
    %v1822 = vpop.permute.xlu0 %1821
    %v1823 = vlaneseq
    %v1824 = vshrl.u32 %v1823, 7
    %v1825 = vsub.s32 7, %v1824
    %v1826 = vrot.slane %v1765, %v1825
    %s1828 = sor.u32 256, 252
    %1829 = vbcast.lane.b32.xlu0 %v1826, %s1828
    %v1830 = vpop.permute.xlu0 %1829
    %v1839 = vmul.f32 %v1756, %v1774
    %v1840 = vmul.f32 %v1757, %v1782
    %v1841 = vmul.f32 %v1758, %v1790
    %v1842 = vmul.f32 %v1759, %v1798
    %v1843 = vmul.f32 %v1760, %v1806
    %v1844 = vmul.f32 %v1761, %v1814
    %v1845 = vmul.f32 %v1762, %v1822
    %v1846 = vmul.f32 %v1763, %v1830
    %v1848 = vlaneseq
    %v1849 = vshrl.u32 %v1848, 7
    %v1850 = vsub.s32 0, %v1849
    %v1851 = vrot.slane %v1745, %v1850
    %1853 = vbcast.lane.b32.xlu0 %v1851, 256
    %v1854 = vpop.permute.xlu0 %1853
    %v1855 = vlaneseq
    %v1856 = vshrl.u32 %v1855, 7
    %v1857 = vsub.s32 1, %v1856
    %v1858 = vrot.slane %v1745, %v1857
    %1860 = vbcast.lane.b32.xlu0 %v1858, 256
    %v1861 = vpop.permute.xlu0 %1860
    %v1862 = vlaneseq
    %v1863 = vshrl.u32 %v1862, 7
    %v1864 = vsub.s32 2, %v1863
    %v1865 = vrot.slane %v1745, %v1864
    %1867 = vbcast.lane.b32.xlu0 %v1865, 256
    %v1868 = vpop.permute.xlu0 %1867
    %v1869 = vlaneseq
    %v1870 = vshrl.u32 %v1869, 7
    %v1871 = vsub.s32 3, %v1870
    %v1872 = vrot.slane %v1745, %v1871
    %1874 = vbcast.lane.b32.xlu0 %v1872, 256
    %v1875 = vpop.permute.xlu0 %1874
    %v1876 = vlaneseq
    %v1877 = vshrl.u32 %v1876, 7
    %v1878 = vsub.s32 4, %v1877
    %v1879 = vrot.slane %v1745, %v1878
    %1881 = vbcast.lane.b32.xlu0 %v1879, 256
    %v1882 = vpop.permute.xlu0 %1881
    %v1883 = vlaneseq
    %v1884 = vshrl.u32 %v1883, 7
    %v1885 = vsub.s32 5, %v1884
    %v1886 = vrot.slane %v1745, %v1885
    %1888 = vbcast.lane.b32.xlu0 %v1886, 256
    %v1889 = vpop.permute.xlu0 %1888
    %v1890 = vlaneseq
    %v1891 = vshrl.u32 %v1890, 7
    %v1892 = vsub.s32 6, %v1891
    %v1893 = vrot.slane %v1745, %v1892
    %1895 = vbcast.lane.b32.xlu0 %v1893, 256
    %v1896 = vpop.permute.xlu0 %1895
    %v1897 = vlaneseq
    %v1898 = vshrl.u32 %v1897, 7
    %v1899 = vsub.s32 7, %v1898
    %v1900 = vrot.slane %v1745, %v1899
    %1902 = vbcast.lane.b32.xlu0 %v1900, 256
    %v1903 = vpop.permute.xlu0 %1902
    %v1912 = vadd.f32 %v1839, %v1854
    %v1913 = vadd.f32 %v1840, %v1861
    %v1914 = vadd.f32 %v1841, %v1868
    %v1915 = vadd.f32 %v1842, %v1875
    %v1916 = vadd.f32 %v1843, %v1882
    %v1917 = vadd.f32 %v1844, %v1889
    %v1918 = vadd.f32 %v1845, %v1896
    %v1919 = vadd.f32 %v1846, %v1903
    %v1920 = vand.u32 2147483647, %v1745
    %v1921 = vadd.f32 %v1920, 1e-09
    %v1922 = vlog2.pop %v1921
    %v1923 = vmul.f32 %v1922, 0.6931472
    %v1924 = vsel %vm100, %v1923, 0.0
    %1925 = vadd.xlane.f32.xlu0 %v1924
    %v1926 = vpop.xlane.xlu0 %1925
    %v1927 = vmul.f32 %v1926, %v452
    %v1928 = vadd.f32 %v1158, %v1927
    %1929 = vst.msk [vmem:[#allocation3] sm:$0xff] %vm100, %v1414
    %1938 = vset.pattern.permute.xlu0 0
    %1939 = vperm.xlu0 %1938, %v1912
    %v1940 = vpop.permute.xlu0 %1939
    %1941 = vset.pattern.permute.xlu0 0
    %1942 = vperm.xlu0 %1941, %v1913
    %v1943 = vpop.permute.xlu0 %1942
    %1944 = vset.pattern.permute.xlu0 0
    %1945 = vperm.xlu0 %1944, %v1914
    %v1946 = vpop.permute.xlu0 %1945
    %1947 = vset.pattern.permute.xlu0 0
    %1948 = vperm.xlu0 %1947, %v1915
    %v1949 = vpop.permute.xlu0 %1948
    %1950 = vset.pattern.permute.xlu0 0
    %1951 = vperm.xlu0 %1950, %v1916
    %v1952 = vpop.permute.xlu0 %1951
    %1953 = vset.pattern.permute.xlu0 0
    %1954 = vperm.xlu0 %1953, %v1917
    %v1955 = vpop.permute.xlu0 %1954
    %1956 = vset.pattern.permute.xlu0 0
    %1957 = vperm.xlu0 %1956, %v1918
    %v1958 = vpop.permute.xlu0 %1957
    %1959 = vset.pattern.permute.xlu0 0
    %1960 = vperm.xlu0 %1959, %v1919
    %v1961 = vpop.permute.xlu0 %1960
    %v1962 = vlaneseq
    %v1963 = vshrl.u32 %v1962, 7
    %v1964 = vsub.s32 %v598, %v1963
    %v1965 = vrot.slane %v1940, %v1964
    %v1966 = vlaneseq
    %v1967 = vshrl.u32 %v1966, 7
    %v1968 = vsub.s32 %v598, %v1967
    %v1969 = vrot.slane %v1943, %v1968
    %v1970 = vlaneseq
    %v1971 = vshrl.u32 %v1970, 7
    %v1972 = vsub.s32 %v598, %v1971
    %v1973 = vrot.slane %v1946, %v1972
    %v1974 = vlaneseq
    %v1975 = vshrl.u32 %v1974, 7
    %v1976 = vsub.s32 %v598, %v1975
    %v1977 = vrot.slane %v1949, %v1976
    %v1978 = vlaneseq
    %v1979 = vshrl.u32 %v1978, 7
    %v1980 = vsub.s32 %v598, %v1979
    %v1981 = vrot.slane %v1952, %v1980
    %v1982 = vlaneseq
    %v1983 = vshrl.u32 %v1982, 7
    %v1984 = vsub.s32 %v598, %v1983
    %v1985 = vrot.slane %v1955, %v1984
    %v1986 = vlaneseq
    %v1987 = vshrl.u32 %v1986, 7
    %v1988 = vsub.s32 %v598, %v1987
    %v1989 = vrot.slane %v1958, %v1988
    %v1990 = vlaneseq
    %v1991 = vshrl.u32 %v1990, 7
    %v1992 = vsub.s32 %v598, %v1991
    %v1993 = vrot.slane %v1961, %v1992
    %v1994 = vsel %vm639, %v1969, %v1965
    %v1995 = vsel %vm641, %v1973, %v1994
    %v1996 = vsel %vm643, %v1977, %v1995
    %v1997 = vsel %vm631, %v1985, %v1981
    %v1998 = vsel %vm633, %v1989, %v1997
    %v1999 = vsel %vm635, %v1993, %v1998
    %2002 = vst.msk [vmem:[#allocation3 - $0x4] sm:$0xf0] %vm1232, %v1996
    %2003 = vst.msk [vmem:[#allocation3 + $0x4] sm:$0xf] %vm1234, %v1999
    %v2004 = vld [vmem:[#allocation3] sm:$0xff]
    %s2005 = scalar_lea.vmem [#allocation7], 128
    %v2006 = vld [vmem:[%s2005] sm:$0xff]
    %v2007 = vld [vmem:[%s2005 + $0x8] sm:$0xff]
    %v2008 = vld [vmem:[%s2005 + $0x10] sm:$0xff]
    %v2009 = vld [vmem:[%s2005 + $0x18] sm:$0xff]
    %v2010 = vld [vmem:[%s2005 + $0x20] sm:$0xff]
    %v2011 = vld [vmem:[%s2005 + $0x28] sm:$0xff]
    %v2012 = vld [vmem:[%s2005 + $0x30] sm:$0xff]
    %v2013 = vld [vmem:[%s2005 + $0x38] sm:$0xff]
    %v2015 = vcombine.high %v2004, %v2004
    %v2017 = vunpack.c.l.s4 1966171168
    %v2018 = vunpack.c.0.s8 %v2017
    %v2019 = vlaneseq
    %v2020 = vshrl.u32 %v2019, 7
    %v2021 = vsub.s32 %v2018, %v2020
    %v2022 = vrot.slane %v2004, %v2021
    %v2024 = vunpack.c.l.s4 1966171168
    %v2025 = vunpack.c.0.s8 %v2024
    %v2026 = vlaneseq
    %v2027 = vshrl.u32 %v2026, 7
    %v2028 = vsub.s32 %v2025, %v2027
    %v2029 = vrot.slane %v2015, %v2028
    %v2030 = vcombine.high %v2022, %v2022
    %v2031 = vcombine.high %v2029, %v2029
    %v2033 = vunpack.c.l.s4 1966171168
    %v2034 = vunpack.c.0.s8 %v2033
    %v2035 = vlaneseq
    %v2036 = vshrl.u32 %v2035, 7
    %v2037 = vsub.s32 %v2034, %v2036
    %v2038 = vrot.slane %v2022, %v2037
    %v2040 = vunpack.c.l.s4 1966171168
    %v2041 = vunpack.c.0.s8 %v2040
    %v2042 = vlaneseq
    %v2043 = vshrl.u32 %v2042, 7
    %v2044 = vsub.s32 %v2041, %v2043
    %v2045 = vrot.slane %v2029, %v2044
    %v2047 = vunpack.c.l.s4 1966171168
    %v2048 = vunpack.c.0.s8 %v2047
    %v2049 = vlaneseq
    %v2050 = vshrl.u32 %v2049, 7
    %v2051 = vsub.s32 %v2048, %v2050
    %v2052 = vrot.slane %v2030, %v2051
    %v2054 = vunpack.c.l.s4 1966171168
    %v2055 = vunpack.c.0.s8 %v2054
    %v2056 = vlaneseq
    %v2057 = vshrl.u32 %v2056, 7
    %v2058 = vsub.s32 %v2055, %v2057
    %v2059 = vrot.slane %v2031, %v2058
    %v2060 = vcombine.high %v2038, %v2038
    %v2061 = vcombine.high %v2045, %v2045
    %v2062 = vcombine.high %v2052, %v2052
    %v2063 = vcombine.high %v2059, %v2059
    %v2064 = vlaneseq
    %v2065 = vshrl.u32 %v2064, 7
    %v2066 = vsub.s32 0, %v2065
    %v2067 = vrot.slane %v2038, %v2066
    %v2068 = vlaneseq
    %v2069 = vshrl.u32 %v2068, 7
    %v2070 = vsub.s32 0, %v2069
    %v2071 = vrot.slane %v2052, %v2070
    %v2072 = vlaneseq
    %v2073 = vshrl.u32 %v2072, 7
    %v2074 = vsub.s32 0, %v2073
    %v2075 = vrot.slane %v2060, %v2074
    %v2076 = vlaneseq
    %v2077 = vshrl.u32 %v2076, 7
    %v2078 = vsub.s32 0, %v2077
    %v2079 = vrot.slane %v2062, %v2078
    %v2080 = vlaneseq
    %v2081 = vshrl.u32 %v2080, 7
    %v2082 = vsub.s32 0, %v2081
    %v2083 = vrot.slane %v2045, %v2082
    %v2084 = vlaneseq
    %v2085 = vshrl.u32 %v2084, 7
    %v2086 = vsub.s32 0, %v2085
    %v2087 = vrot.slane %v2059, %v2086
    %v2088 = vlaneseq
    %v2089 = vshrl.u32 %v2088, 7
    %v2090 = vsub.s32 0, %v2089
    %v2091 = vrot.slane %v2061, %v2090
    %v2092 = vlaneseq
    %v2093 = vshrl.u32 %v2092, 7
    %v2094 = vsub.s32 0, %v2093
    %v2095 = vrot.slane %v2063, %v2094
    %v2104 = vmul.f32 %v2006, %v2067
    %v2105 = vmul.f32 %v2007, %v2071
    %v2106 = vmul.f32 %v2008, %v2075
    %v2107 = vmul.f32 %v2009, %v2079
    %v2108 = vmul.f32 %v2010, %v2083
    %v2109 = vmul.f32 %v2011, %v2087
    %v2110 = vmul.f32 %v2012, %v2091
    %v2111 = vmul.f32 %v2013, %v2095
    %v2112 = vsel %vm105, %v2104, 0.0
    %2113 = vadd.xlane.f32.xlu0 %v2112
    %v2114 = vpop.xlane.xlu0 %2113
    %v2115 = vsel %vm105, %v2105, 0.0
    %2116 = vadd.xlane.f32.xlu0 %v2115
    %v2117 = vpop.xlane.xlu0 %2116
    %v2118 = vsel %vm105, %v2106, 0.0
    %2119 = vadd.xlane.f32.xlu0 %v2118
    %v2120 = vpop.xlane.xlu0 %2119
    %v2121 = vsel %vm105, %v2107, 0.0
    %2122 = vadd.xlane.f32.xlu0 %v2121
    %v2123 = vpop.xlane.xlu0 %2122
    %v2124 = vsel %vm105, %v2108, 0.0
    %2125 = vadd.xlane.f32.xlu0 %v2124
    %v2126 = vpop.xlane.xlu0 %2125
    %v2127 = vsel %vm105, %v2109, 0.0
    %2128 = vadd.xlane.f32.xlu0 %v2127
    %v2129 = vpop.xlane.xlu0 %2128
    %v2130 = vsel %vm105, %v2110, 0.0
    %2131 = vadd.xlane.f32.xlu0 %v2130
    %v2132 = vpop.xlane.xlu0 %2131
    %v2133 = vsel %vm105, %v2111, 0.0
    %2134 = vadd.xlane.f32.xlu0 %v2133
    %v2135 = vpop.xlane.xlu0 %2134
    %2136 = vst [vmem:[%s11] sm:$0xff] 0.0
    %v2145 = vlaneseq
    %v2146 = vshrl.u32 %v2145, 7
    %v2147 = vsub.s32 %v598, %v2146
    %v2148 = vrot.slane %v2114, %v2147
    %v2149 = vlaneseq
    %v2150 = vshrl.u32 %v2149, 7
    %v2151 = vsub.s32 %v598, %v2150
    %v2152 = vrot.slane %v2117, %v2151
    %v2153 = vlaneseq
    %v2154 = vshrl.u32 %v2153, 7
    %v2155 = vsub.s32 %v598, %v2154
    %v2156 = vrot.slane %v2120, %v2155
    %v2157 = vlaneseq
    %v2158 = vshrl.u32 %v2157, 7
    %v2159 = vsub.s32 %v598, %v2158
    %v2160 = vrot.slane %v2123, %v2159
    %v2161 = vlaneseq
    %v2162 = vshrl.u32 %v2161, 7
    %v2163 = vsub.s32 %v598, %v2162
    %v2164 = vrot.slane %v2126, %v2163
    %v2165 = vlaneseq
    %v2166 = vshrl.u32 %v2165, 7
    %v2167 = vsub.s32 %v598, %v2166
    %v2168 = vrot.slane %v2129, %v2167
    %v2169 = vlaneseq
    %v2170 = vshrl.u32 %v2169, 7
    %v2171 = vsub.s32 %v598, %v2170
    %v2172 = vrot.slane %v2132, %v2171
    %v2173 = vlaneseq
    %v2174 = vshrl.u32 %v2173, 7
    %v2175 = vsub.s32 %v598, %v2174
    %v2176 = vrot.slane %v2135, %v2175
    %v2177 = vsel %vm631, %v2152, %v2148
    %v2178 = vsel %vm633, %v2156, %v2177
    %v2179 = vsel %vm635, %v2160, %v2178
    %v2180 = vsel %vm637, %v2164, %v2179
    %v2181 = vsel %vm639, %v2168, %v2180
    %v2182 = vsel %vm641, %v2172, %v2181
    %v2183 = vsel %vm643, %v2176, %v2182
    %2185 = vst.msk [vmem:[%s11] sm:$0xff] %vm105, %v2183
    %vm2186 = vcmask 72768
    %2187 = vst.msk [vmem:[%s11] sm:$0xff] %vm2186, %v1928
    // Predicated region
    $region62: #{normalizing_flow_forward.1} parent=1 // pred_check
      _
    $region63: #{normalizing_flow_forward.1} parent=1 // pred_check_branch
      %2189 = sbr.rel (0) target = $region65
    $region64: #{normalizing_flow_forward.1} parent=1 // pred_region
      _
    $region65: #{normalizing_flow_forward.1} parent=1 // pred_fallthru
      _
    // Predicated region
    $region66: #{normalizing_flow_forward.1} parent=1 // pred_check
      _
    $region67: #{normalizing_flow_forward.1} parent=1 // pred_check_branch
      %2191 = sbr.rel (0) target = $region69
    $region68: #{normalizing_flow_forward.1} parent=1 // pred_region
      _
    $region69: #{normalizing_flow_forward.1} parent=1 // pred_fallthru
      _
    %2192 = vsyncpa [#allocation6], 1
    %2193 = vsyncpa [#allocation8], 1
    %2194 = vsyncpa [#allocation11], 1

</llo_original>
